<compile_context>
chip_gen: v7x
topology: tpu7x:2x2x1
jax: 0.10.0
libtpu: 0.0.40
codegen_flags: <defaults>
</compile_context>

<pallas_src>
import math

import jax
import jax.numpy as jnp
from jax.experimental import pallas as pl
from jax.experimental.pallas import tpu as pltpu


def _round_up(n, m):
    return ((n + m - 1) // m) * m


def _make_rnn_kernel(t_blk, h_pad):
    def kernel(xh_ref, wcat_ref, by_ref, o_ref, carry_ref):
        """One block of T_BLK recurrence steps per grid iteration.

        xh_ref:    (T_BLK, B_pad, h_pad)        precomputed Wx x_t + bh + bx
        wcat_ref:  (h_pad, h_pad + out_pad)     [Whh^T | Why^T], zero-padded
        by_ref:    (1, out_pad)                 output bias
        o_ref:     (T_BLK, B_pad, out_pad)      y for this time block
        carry_ref: (B_pad, h_pad) f32 scratch   = Whh^T contribution of h_{t-1},
                                                  persists across grid steps
        """
        @pl.when(pl.program_id(0) == 0)
        def _():
            carry_ref[...] = jnp.zeros_like(carry_ref)

        wcat = wcat_ref[...]          # resident weights, loaded once per block
        by = by_ref[...]
        carry = carry_ref[...]        # h_{t-1} @ Whh^T (zero for t == 0)

        # Statically unrolled recurrence: indices are compile-time constants,
        # so every slice / store below is a static (free) slice.
        for i in range(t_blk):
            pre = carry + xh_ref[i]                       # (B_pad, h_pad) f32
            h = jax.nn.sigmoid(pre)                       # EUP exp + VPU, f32
            # ONE fused MXU matmul per timestep: [next-carry | y_t].
            cat = jnp.dot(h.astype(wcat.dtype), wcat,
                          preferred_element_type=jnp.float32)
            carry = cat[:, :h_pad]                        # Whh h_t, for step i+1
            o_ref[i] = (cat[:, h_pad:] + by).astype(o_ref.dtype)

        carry_ref[...] = carry
    return kernel


def rnn_pallas(params, x, hidden_dim, output_dim, *, t_blk=16,
               weight_dtype=jnp.float32):
    """Forward pass of the PyTorch RNN module, fused into one Pallas kernel.

    params: (whh, bh, wxh, bx, why, by) in PyTorch nn.Linear layout
            (weight: (out, in), bias: (out,)).
    x:      (batch, seq, input_dim)
    returns (batch, seq, output_dim)
    """
    whh, bh, wxh, bx, why, by = params
    B, S, _ = x.shape

    B_pad = _round_up(B, 8)
    h_pad = _round_up(hidden_dim, 128)
    out_pad = _round_up(output_dim, 128)
    t_blk = _round_up(min(t_blk, _round_up(S, 8)), 8)
    S_pad = _round_up(S, t_blk)
    n_blocks = S_pad // t_blk

    # --- Hoisted, time-independent input projection: one big matmul over S*B
    # rows (plain XLA dot per perf review), emitted directly in time-major
    # layout so no separate transpose pass over x is needed.
    xh = jnp.einsum("bsi,hi->sbh", x, wxh) + (bh + bx)          # (S, B, hidden)
    xh = jnp.pad(xh.astype(jnp.float32),
                 ((0, S_pad - S), (0, B_pad - B), (0, h_pad - hidden_dim)))

    # --- Fused per-step weight [Whh^T | Why^T], zero-padded (padding rows are
    # zero, so the sigmoid(0)=0.5 values in padded hidden columns never reach
    # real outputs).  Optionally bf16 (zeros survive the cast).
    wcat = jnp.zeros((h_pad, h_pad + out_pad), weight_dtype)
    wcat = wcat.at[:hidden_dim, :hidden_dim].set(whh.T.astype(weight_dtype))
    wcat = wcat.at[:hidden_dim, h_pad:h_pad + output_dim].set(
        why.T.astype(weight_dtype))
    by_p = jnp.pad(by, (0, out_pad - output_dim)).reshape(1, out_pad)
    by_p = by_p.astype(jnp.float32)

    kernel = _make_rnn_kernel(t_blk, h_pad)

    out = pl.pallas_call(
        kernel,
        out_shape=jax.ShapeDtypeStruct((S_pad, B_pad, out_pad), x.dtype),
        grid_spec=pltpu.PrefetchScalarGridSpec(
            num_scalar_prefetch=0,
            grid=(n_blocks,),
            in_specs=[
                # streamed per time block (double-buffered by the pipeline)
                pl.BlockSpec((t_blk, B_pad, h_pad), lambda t: (t, 0, 0)),
                # resident weights / bias (constant block index -> one DMA).
                # For production hidden sizes on v7x, add
                # pipeline_mode=pl.Buffered(1) here to avoid double-buffering.
                pl.BlockSpec((h_pad, h_pad + out_pad), lambda t: (0, 0)),
                pl.BlockSpec((1, out_pad), lambda t: (0, 0)),
            ],
            out_specs=pl.BlockSpec((t_blk, B_pad, out_pad), lambda t: (t, 0, 0)),
            scratch_shapes=[pltpu.VMEM((B_pad, h_pad), jnp.float32)],
        ),
        compiler_params=pltpu.CompilerParams(
            # Recurrence over time: must run sequentially.
            dimension_semantics=("arbitrary",),
            vmem_limit_bytes=32 * 1024 * 1024,
        ),
    )(xh, wcat, by_p)

    # (S_pad, B_pad, out_pad) -> (batch, seq, output_dim); small output-side
    # transpose only (x-side transpose was folded into the einsum above).
    return jnp.transpose(out, (1, 0, 2))[:B, :S, :output_dim]


def init_rnn_params(key, input_dim, hidden_dim, output_dim, dtype=jnp.float32):
    """PyTorch nn.Linear-style uniform(-1/sqrt(fan_in), +1/sqrt(fan_in)) init."""
    def linear(key, fan_in, fan_out):
        kw, kb = jax.random.split(key)
        bound = 1.0 / math.sqrt(fan_in)
        w = jax.random.uniform(kw, (fan_out, fan_in), dtype, -bound, bound)
        b = jax.random.uniform(kb, (fan_out,), dtype, -bound, bound)
        return w, b

    k1, k2, k3 = jax.random.split(key, 3)
    whh, bh = linear(k1, hidden_dim, hidden_dim)   # Wh
    wxh, bx = linear(k2, input_dim, hidden_dim)    # Wx
    why, by = linear(k3, hidden_dim, output_dim)   # Wy
    return whh, bh, wxh, bx, why, by


def rnn_ref(params, x):
    """Pure-JAX reference matching the PyTorch forward exactly."""
    whh, bh, wxh, bx, why, by = params
    B, S, _ = x.shape
    h = jnp.zeros((B, whh.shape[0]), x.dtype)
    outs = []
    for t in range(S):
        pre = h @ whh.T + bh + x[:, t, :] @ wxh.T + bx
        h = 1.0 / (1.0 + jnp.exp(-pre))
        outs.append(h @ why.T + by)
    return jnp.stack(outs, axis=1)   # (batch, seq, output_dim)


if __name__ == "__main__":
    # config: input_dim=16, hidden_dim=32, output_dim=8, batch=4, seq=64
    # (seq=64 with t_blk=16 -> 4 grid steps, exercising the blocked pipeline).
    input_dim, hidden_dim, output_dim = 16, 32, 8
    batch, seq = 4, 64

    key = jax.random.PRNGKey(0)
    key, kx = jax.random.split(key)
    x = jax.random.normal(kx, (batch, seq, input_dim), dtype=jnp.float32)
    params = init_rnn_params(key, input_dim, hidden_dim, output_dim)

    y_ref = jax.block_until_ready(rnn_ref(params, x))

    # Exact (f32-weight) path: must match the reference tightly.
    y = jax.block_until_ready(
        rnn_pallas(params, x, hidden_dim, output_dim, t_blk=16))
    assert y.shape == (batch, seq, output_dim)
    assert jnp.allclose(y, y_ref, atol=2e-4, rtol=2e-4), float(
        jnp.max(jnp.abs(y - y_ref)))

    # bf16-weight fast path (perf-review option): looser tolerance vs f32 ref.
    y_bf16 = jax.block_until_ready(
        rnn_pallas(params, x, hidden_dim, output_dim, t_blk=16,
                   weight_dtype=jnp.bfloat16))
    assert jnp.allclose(y_bf16, y_ref, atol=5e-2, rtol=5e-2), float(
        jnp.max(jnp.abs(y_bf16 - y_ref)))

    print("KERNEL_OK")
</pallas_src>

<mosaic_0001>
module attributes {stable_mosaic.version = 11 : i64} {
  func.func @kernel(%arg0: i32, %arg1: memref<16x8x128xf32, #tpu.memory_space<vmem>>, %arg2: memref<128x256xf32, #tpu.memory_space<vmem>>, %arg3: memref<1x128xf32, #tpu.memory_space<vmem>>, %arg4: memref<16x8x128xf32, #tpu.memory_space<vmem>>, %arg5: memref<8x128xf32, #tpu.memory_space<vmem>>) attributes {dimension_semantics = [#tpu.dimension_semantics<arbitrary>], iteration_bounds = array<i64: 4>, scalar_prefetch = 0 : i64, scratch_operands = 1 : i64, tpu.core_type = #tpu.core_type<tc>, window_params = [{transform_indices = @transform_0, window_bounds = array<i64: 16, 8, 128>}, {pipeline_mode = #tpu.pipeline_mode<synchronous>, transform_indices = @transform_1, window_bounds = array<i64: 128, 256>}, {pipeline_mode = #tpu.pipeline_mode<synchronous>, transform_indices = @transform_2, window_bounds = array<i64: 1, 128>}, {transform_indices = @transform_3, window_bounds = array<i64: 16, 8, 128>}]} {
    %c0_i32 = arith.constant 0 : i32
    %0 = arith.cmpi eq, %arg0, %c0_i32 : i32
    %1 = arith.extui %0 : i1 to i32
    %c0_i32_0 = arith.constant 0 : i32
    %2 = arith.cmpi ne, %1, %c0_i32_0 : i32
    scf.if %2 {
      %cst_120 = arith.constant 0.000000e+00 : f32
      %263 = vector.broadcast %cst_120 : f32 to vector<8x128xf32>
      %c0_121 = arith.constant 0 : index
      %c0_122 = arith.constant 0 : index
      %264 = vector.load %arg5[%c0_121, %c0_122] : memref<8x128xf32, #tpu.memory_space<vmem>>, vector<8x128xf32>
      tpu.vector_store %arg5[%c0_121, %c0_122], %263 {strides = array<i32>} : memref<8x128xf32, #tpu.memory_space<vmem>>, vector<8x128xf32>,
    } else {
    }
    %c0 = arith.constant 0 : index
    %c0_1 = arith.constant 0 : index
    %3 = vector.load %arg2[%c0, %c0_1] : memref<128x256xf32, #tpu.memory_space<vmem>>, vector<128x256xf32>
    %c0_2 = arith.constant 0 : index
    %c0_3 = arith.constant 0 : index
    %4 = vector.load %arg3[%c0_2, %c0_3] : memref<1x128xf32, #tpu.memory_space<vmem>>, vector<1x128xf32>
    %c0_4 = arith.constant 0 : index
    %c0_5 = arith.constant 0 : index
    %5 = vector.load %arg5[%c0_4, %c0_5] : memref<8x128xf32, #tpu.memory_space<vmem>>, vector<8x128xf32>
    %c0_6 = arith.constant 0 : index
    %c0_7 = arith.constant 0 : index
    %c0_8 = arith.constant 0 : index
    %6 = vector.load %arg1[%c0_6, %c0_7, %c0_8] : memref<16x8x128xf32, #tpu.memory_space<vmem>>, vector<1x8x128xf32>
    %7 = vector.shape_cast %6 : vector<1x8x128xf32> to vector<8x128xf32>
    %8 = arith.addf %5, %7 : vector<8x128xf32>
    %9 = arith.negf %8 : vector<8x128xf32>
    %10 = math.exp %9 : vector<8x128xf32>
    %cst = arith.constant 1.000000e+00 : f32
    %11 = vector.broadcast %cst : f32 to vector<8x128xf32>
    %12 = arith.addf %11, %10 : vector<8x128xf32>
    %13 = arith.divf %11, %12 : vector<8x128xf32>
    %cst_9 = arith.constant dense<0.000000e+00> : vector<8x256xf32>
    %14 = tpu.matmul %13, %3, %cst_9 {dimension_numbers = #tpu.dot_dimension_numbers<[1], [0], [0], [1], [0, 0, 1, 1], [], []>} : vector<8x128xf32>, vector<128x256xf32>, vector<8x256xf32> -> vector<8x256xf32>
    %15 = vector.extract_strided_slice %14 {offsets = [0, 0], sizes = [8, 128], strides = [1, 1]} : vector<8x256xf32> to vector<8x128xf32>
    %16 = vector.extract_strided_slice %14 {offsets = [0, 128], sizes = [8, 128], strides = [1, 1]} : vector<8x256xf32> to vector<8x128xf32>
    %17 = vector.broadcast %4 : vector<1x128xf32> to vector<8x128xf32>
    %18 = arith.addf %16, %17 : vector<8x128xf32>
    %c0_10 = arith.constant 0 : index
    %c0_11 = arith.constant 0 : index
    %c0_12 = arith.constant 0 : index
    %19 = vector.load %arg4[%c0_10, %c0_11, %c0_12] : memref<16x8x128xf32, #tpu.memory_space<vmem>>, vector<1x8x128xf32>
    %20 = vector.shape_cast %19 : vector<1x8x128xf32> to vector<8x128xf32>
    %21 = vector.shape_cast %18 : vector<8x128xf32> to vector<1x8x128xf32>
    tpu.vector_store %arg4[%c0_10, %c0_11, %c0_12], %21 {strides = array<i32>} : memref<16x8x128xf32, #tpu.memory_space<vmem>>, vector<1x8x128xf32>,
    %c1 = arith.constant 1 : index
    %c0_13 = arith.constant 0 : index
    %c0_14 = arith.constant 0 : index
    %22 = vector.load %arg1[%c1, %c0_13, %c0_14] : memref<16x8x128xf32, #tpu.memory_space<vmem>>, vector<1x8x128xf32>
    %23 = vector.shape_cast %22 : vector<1x8x128xf32> to vector<8x128xf32>
    %24 = arith.addf %15, %23 : vector<8x128xf32>
    %25 = arith.negf %24 : vector<8x128xf32>
    %26 = math.exp %25 : vector<8x128xf32>
    %cst_15 = arith.constant 1.000000e+00 : f32
    %27 = vector.broadcast %cst_15 : f32 to vector<8x128xf32>
    %28 = arith.addf %27, %26 : vector<8x128xf32>
    %29 = arith.divf %27, %28 : vector<8x128xf32>
    %cst_16 = arith.constant dense<0.000000e+00> : vector<8x256xf32>
    %30 = tpu.matmul %29, %3, %cst_16 {dimension_numbers = #tpu.dot_dimension_numbers<[1], [0], [0], [1], [0, 0, 1, 1], [], []>} : vector<8x128xf32>, vector<128x256xf32>, vector<8x256xf32> -> vector<8x256xf32>
    %31 = vector.extract_strided_slice %30 {offsets = [0, 0], sizes = [8, 128], strides = [1, 1]} : vector<8x256xf32> to vector<8x128xf32>
    %32 = vector.extract_strided_slice %30 {offsets = [0, 128], sizes = [8, 128], strides = [1, 1]} : vector<8x256xf32> to vector<8x128xf32>
    %33 = vector.broadcast %4 : vector<1x128xf32> to vector<8x128xf32>
    %34 = arith.addf %32, %33 : vector<8x128xf32>
    %c1_17 = arith.constant 1 : index
    %c0_18 = arith.constant 0 : index
    %c0_19 = arith.constant 0 : index
    %35 = vector.load %arg4[%c1_17, %c0_18, %c0_19] : memref<16x8x128xf32, #tpu.memory_space<vmem>>, vector<1x8x128xf32>
    %36 = vector.shape_cast %35 : vector<1x8x128xf32> to vector<8x128xf32>
    %37 = vector.shape_cast %34 : vector<8x128xf32> to vector<1x8x128xf32>
    tpu.vector_store %arg4[%c1_17, %c0_18, %c0_19], %37 {strides = array<i32>} : memref<16x8x128xf32, #tpu.memory_space<vmem>>, vector<1x8x128xf32>,
    %c2 = arith.constant 2 : index
    %c0_20 = arith.constant 0 : index
    %c0_21 = arith.constant 0 : index
    %38 = vector.load %arg1[%c2, %c0_20, %c0_21] : memref<16x8x128xf32, #tpu.memory_space<vmem>>, vector<1x8x128xf32>
    %39 = vector.shape_cast %38 : vector<1x8x128xf32> to vector<8x128xf32>
    %40 = arith.addf %31, %39 : vector<8x128xf32>
    %41 = arith.negf %40 : vector<8x128xf32>
    %42 = math.exp %41 : vector<8x128xf32>
    %cst_22 = arith.constant 1.000000e+00 : f32
    %43 = vector.broadcast %cst_22 : f32 to vector<8x128xf32>
    %44 = arith.addf %43, %42 : vector<8x128xf32>
    %45 = arith.divf %43, %44 : vector<8x128xf32>
    %cst_23 = arith.constant dense<0.000000e+00> : vector<8x256xf32>
    %46 = tpu.matmul %45, %3, %cst_23 {dimension_numbers = #tpu.dot_dimension_numbers<[1], [0], [0], [1], [0, 0, 1, 1], [], []>} : vector<8x128xf32>, vector<128x256xf32>, vector<8x256xf32> -> vector<8x256xf32>
    %47 = vector.extract_strided_slice %46 {offsets = [0, 0], sizes = [8, 128], strides = [1, 1]} : vector<8x256xf32> to vector<8x128xf32>
    %48 = vector.extract_strided_slice %46 {offsets = [0, 128], sizes = [8, 128], strides = [1, 1]} : vector<8x256xf32> to vector<8x128xf32>
    %49 = vector.broadcast %4 : vector<1x128xf32> to vector<8x128xf32>
    %50 = arith.addf %48, %49 : vector<8x128xf32>
    %c2_24 = arith.constant 2 : index
    %c0_25 = arith.constant 0 : index
    %c0_26 = arith.constant 0 : index
    %51 = vector.load %arg4[%c2_24, %c0_25, %c0_26] : memref<16x8x128xf32, #tpu.memory_space<vmem>>, vector<1x8x128xf32>
    %52 = vector.shape_cast %51 : vector<1x8x128xf32> to vector<8x128xf32>
    %53 = vector.shape_cast %50 : vector<8x128xf32> to vector<1x8x128xf32>
    tpu.vector_store %arg4[%c2_24, %c0_25, %c0_26], %53 {strides = array<i32>} : memref<16x8x128xf32, #tpu.memory_space<vmem>>, vector<1x8x128xf32>,
    %c3 = arith.constant 3 : index
    %c0_27 = arith.constant 0 : index
    %c0_28 = arith.constant 0 : index
    %54 = vector.load %arg1[%c3, %c0_27, %c0_28] : memref<16x8x128xf32, #tpu.memory_space<vmem>>, vector<1x8x128xf32>
    %55 = vector.shape_cast %54 : vector<1x8x128xf32> to vector<8x128xf32>
    %56 = arith.addf %47, %55 : vector<8x128xf32>
    %57 = arith.negf %56 : vector<8x128xf32>
    %58 = math.exp %57 : vector<8x128xf32>
    %cst_29 = arith.constant 1.000000e+00 : f32
    %59 = vector.broadcast %cst_29 : f32 to vector<8x128xf32>
    %60 = arith.addf %59, %58 : vector<8x128xf32>
    %61 = arith.divf %59, %60 : vector<8x128xf32>
    %cst_30 = arith.constant dense<0.000000e+00> : vector<8x256xf32>
    %62 = tpu.matmul %61, %3, %cst_30 {dimension_numbers = #tpu.dot_dimension_numbers<[1], [0], [0], [1], [0, 0, 1, 1], [], []>} : vector<8x128xf32>, vector<128x256xf32>, vector<8x256xf32> -> vector<8x256xf32>
    %63 = vector.extract_strided_slice %62 {offsets = [0, 0], sizes = [8, 128], strides = [1, 1]} : vector<8x256xf32> to vector<8x128xf32>
    %64 = vector.extract_strided_slice %62 {offsets = [0, 128], sizes = [8, 128], strides = [1, 1]} : vector<8x256xf32> to vector<8x128xf32>
    %65 = vector.broadcast %4 : vector<1x128xf32> to vector<8x128xf32>
    %66 = arith.addf %64, %65 : vector<8x128xf32>
    %c3_31 = arith.constant 3 : index
    %c0_32 = arith.constant 0 : index
    %c0_33 = arith.constant 0 : index
    %67 = vector.load %arg4[%c3_31, %c0_32, %c0_33] : memref<16x8x128xf32, #tpu.memory_space<vmem>>, vector<1x8x128xf32>
    %68 = vector.shape_cast %67 : vector<1x8x128xf32> to vector<8x128xf32>
    %69 = vector.shape_cast %66 : vector<8x128xf32> to vector<1x8x128xf32>
    tpu.vector_store %arg4[%c3_31, %c0_32, %c0_33], %69 {strides = array<i32>} : memref<16x8x128xf32, #tpu.memory_space<vmem>>, vector<1x8x128xf32>,
    %c4 = arith.constant 4 : index
    %c0_34 = arith.constant 0 : index
    %c0_35 = arith.constant 0 : index
    %70 = vector.load %arg1[%c4, %c0_34, %c0_35] : memref<16x8x128xf32, #tpu.memory_space<vmem>>, vector<1x8x128xf32>
    %71 = vector.shape_cast %70 : vector<1x8x128xf32> to vector<8x128xf32>
    %72 = arith.addf %63, %71 : vector<8x128xf32>
    %73 = arith.negf %72 : vector<8x128xf32>
    %74 = math.exp %73 : vector<8x128xf32>
    %cst_36 = arith.constant 1.000000e+00 : f32
    %75 = vector.broadcast %cst_36 : f32 to vector<8x128xf32>
    %76 = arith.addf %75, %74 : vector<8x128xf32>
    %77 = arith.divf %75, %76 : vector<8x128xf32>
    %cst_37 = arith.constant dense<0.000000e+00> : vector<8x256xf32>
    %78 = tpu.matmul %77, %3, %cst_37 {dimension_numbers = #tpu.dot_dimension_numbers<[1], [0], [0], [1], [0, 0, 1, 1], [], []>} : vector<8x128xf32>, vector<128x256xf32>, vector<8x256xf32> -> vector<8x256xf32>
    %79 = vector.extract_strided_slice %78 {offsets = [0, 0], sizes = [8, 128], strides = [1, 1]} : vector<8x256xf32> to vector<8x128xf32>
    %80 = vector.extract_strided_slice %78 {offsets = [0, 128], sizes = [8, 128], strides = [1, 1]} : vector<8x256xf32> to vector<8x128xf32>
    %81 = vector.broadcast %4 : vector<1x128xf32> to vector<8x128xf32>
    %82 = arith.addf %80, %81 : vector<8x128xf32>
    %c4_38 = arith.constant 4 : index
    %c0_39 = arith.constant 0 : index
    %c0_40 = arith.constant 0 : index
    %83 = vector.load %arg4[%c4_38, %c0_39, %c0_40] : memref<16x8x128xf32, #tpu.memory_space<vmem>>, vector<1x8x128xf32>
    %84 = vector.shape_cast %83 : vector<1x8x128xf32> to vector<8x128xf32>
    %85 = vector.shape_cast %82 : vector<8x128xf32> to vector<1x8x128xf32>
    tpu.vector_store %arg4[%c4_38, %c0_39, %c0_40], %85 {strides = array<i32>} : memref<16x8x128xf32, #tpu.memory_space<vmem>>, vector<1x8x128xf32>,
    %c5 = arith.constant 5 : index
    %c0_41 = arith.constant 0 : index
    %c0_42 = arith.constant 0 : index
    %86 = vector.load %arg1[%c5, %c0_41, %c0_42] : memref<16x8x128xf32, #tpu.memory_space<vmem>>, vector<1x8x128xf32>
    %87 = vector.shape_cast %86 : vector<1x8x128xf32> to vector<8x128xf32>
    %88 = arith.addf %79, %87 : vector<8x128xf32>
    %89 = arith.negf %88 : vector<8x128xf32>
    %90 = math.exp %89 : vector<8x128xf32>
    %cst_43 = arith.constant 1.000000e+00 : f32
    %91 = vector.broadcast %cst_43 : f32 to vector<8x128xf32>
    %92 = arith.addf %91, %90 : vector<8x128xf32>
    %93 = arith.divf %91, %92 : vector<8x128xf32>
    %cst_44 = arith.constant dense<0.000000e+00> : vector<8x256xf32>
    %94 = tpu.matmul %93, %3, %cst_44 {dimension_numbers = #tpu.dot_dimension_numbers<[1], [0], [0], [1], [0, 0, 1, 1], [], []>} : vector<8x128xf32>, vector<128x256xf32>, vector<8x256xf32> -> vector<8x256xf32>
    %95 = vector.extract_strided_slice %94 {offsets = [0, 0], sizes = [8, 128], strides = [1, 1]} : vector<8x256xf32> to vector<8x128xf32>
    %96 = vector.extract_strided_slice %94 {offsets = [0, 128], sizes = [8, 128], strides = [1, 1]} : vector<8x256xf32> to vector<8x128xf32>
    %97 = vector.broadcast %4 : vector<1x128xf32> to vector<8x128xf32>
    %98 = arith.addf %96, %97 : vector<8x128xf32>
    %c5_45 = arith.constant 5 : index
    %c0_46 = arith.constant 0 : index
    %c0_47 = arith.constant 0 : index
    %99 = vector.load %arg4[%c5_45, %c0_46, %c0_47] : memref<16x8x128xf32, #tpu.memory_space<vmem>>, vector<1x8x128xf32>
    %100 = vector.shape_cast %99 : vector<1x8x128xf32> to vector<8x128xf32>
    %101 = vector.shape_cast %98 : vector<8x128xf32> to vector<1x8x128xf32>
    tpu.vector_store %arg4[%c5_45, %c0_46, %c0_47], %101 {strides = array<i32>} : memref<16x8x128xf32, #tpu.memory_space<vmem>>, vector<1x8x128xf32>,
    %c6 = arith.constant 6 : index
    %c0_48 = arith.constant 0 : index
    %c0_49 = arith.constant 0 : index
    %102 = vector.load %arg1[%c6, %c0_48, %c0_49] : memref<16x8x128xf32, #tpu.memory_space<vmem>>, vector<1x8x128xf32>
    %103 = vector.shape_cast %102 : vector<1x8x128xf32> to vector<8x128xf32>
    %104 = arith.addf %95, %103 : vector<8x128xf32>
    %105 = arith.negf %104 : vector<8x128xf32>
    %106 = math.exp %105 : vector<8x128xf32>
    %cst_50 = arith.constant 1.000000e+00 : f32
    %107 = vector.broadcast %cst_50 : f32 to vector<8x128xf32>
    %108 = arith.addf %107, %106 : vector<8x128xf32>
    %109 = arith.divf %107, %108 : vector<8x128xf32>
    %cst_51 = arith.constant dense<0.000000e+00> : vector<8x256xf32>
    %110 = tpu.matmul %109, %3, %cst_51 {dimension_numbers = #tpu.dot_dimension_numbers<[1], [0], [0], [1], [0, 0, 1, 1], [], []>} : vector<8x128xf32>, vector<128x256xf32>, vector<8x256xf32> -> vector<8x256xf32>
    %111 = vector.extract_strided_slice %110 {offsets = [0, 0], sizes = [8, 128], strides = [1, 1]} : vector<8x256xf32> to vector<8x128xf32>
    %112 = vector.extract_strided_slice %110 {offsets = [0, 128], sizes = [8, 128], strides = [1, 1]} : vector<8x256xf32> to vector<8x128xf32>
    %113 = vector.broadcast %4 : vector<1x128xf32> to vector<8x128xf32>
    %114 = arith.addf %112, %113 : vector<8x128xf32>
    %c6_52 = arith.constant 6 : index
    %c0_53 = arith.constant 0 : index
    %c0_54 = arith.constant 0 : index
    %115 = vector.load %arg4[%c6_52, %c0_53, %c0_54] : memref<16x8x128xf32, #tpu.memory_space<vmem>>, vector<1x8x128xf32>
    %116 = vector.shape_cast %115 : vector<1x8x128xf32> to vector<8x128xf32>
    %117 = vector.shape_cast %114 : vector<8x128xf32> to vector<1x8x128xf32>
    tpu.vector_store %arg4[%c6_52, %c0_53, %c0_54], %117 {strides = array<i32>} : memref<16x8x128xf32, #tpu.memory_space<vmem>>, vector<1x8x128xf32>,
    %c7 = arith.constant 7 : index
    %c0_55 = arith.constant 0 : index
    %c0_56 = arith.constant 0 : index
    %118 = vector.load %arg1[%c7, %c0_55, %c0_56] : memref<16x8x128xf32, #tpu.memory_space<vmem>>, vector<1x8x128xf32>
    %119 = vector.shape_cast %118 : vector<1x8x128xf32> to vector<8x128xf32>
    %120 = arith.addf %111, %119 : vector<8x128xf32>
    %121 = arith.negf %120 : vector<8x128xf32>
    %122 = math.exp %121 : vector<8x128xf32>
    %cst_57 = arith.constant 1.000000e+00 : f32
    %123 = vector.broadcast %cst_57 : f32 to vector<8x128xf32>
    %124 = arith.addf %123, %122 : vector<8x128xf32>
    %125 = arith.divf %123, %124 : vector<8x128xf32>
    %cst_58 = arith.constant dense<0.000000e+00> : vector<8x256xf32>
    %126 = tpu.matmul %125, %3, %cst_58 {dimension_numbers = #tpu.dot_dimension_numbers<[1], [0], [0], [1], [0, 0, 1, 1], [], []>} : vector<8x128xf32>, vector<128x256xf32>, vector<8x256xf32> -> vector<8x256xf32>
    %127 = vector.extract_strided_slice %126 {offsets = [0, 0], sizes = [8, 128], strides = [1, 1]} : vector<8x256xf32> to vector<8x128xf32>
    %128 = vector.extract_strided_slice %126 {offsets = [0, 128], sizes = [8, 128], strides = [1, 1]} : vector<8x256xf32> to vector<8x128xf32>
    %129 = vector.broadcast %4 : vector<1x128xf32> to vector<8x128xf32>
    %130 = arith.addf %128, %129 : vector<8x128xf32>
    %c7_59 = arith.constant 7 : index
    %c0_60 = arith.constant 0 : index
    %c0_61 = arith.constant 0 : index
    %131 = vector.load %arg4[%c7_59, %c0_60, %c0_61] : memref<16x8x128xf32, #tpu.memory_space<vmem>>, vector<1x8x128xf32>
    %132 = vector.shape_cast %131 : vector<1x8x128xf32> to vector<8x128xf32>
    %133 = vector.shape_cast %130 : vector<8x128xf32> to vector<1x8x128xf32>
    tpu.vector_store %arg4[%c7_59, %c0_60, %c0_61], %133 {strides = array<i32>} : memref<16x8x128xf32, #tpu.memory_space<vmem>>, vector<1x8x128xf32>,
    %c8 = arith.constant 8 : index
    %c0_62 = arith.constant 0 : index
    %c0_63 = arith.constant 0 : index
    %134 = vector.load %arg1[%c8, %c0_62, %c0_63] : memref<16x8x128xf32, #tpu.memory_space<vmem>>, vector<1x8x128xf32>
    %135 = vector.shape_cast %134 : vector<1x8x128xf32> to vector<8x128xf32>
    %136 = arith.addf %127, %135 : vector<8x128xf32>
    %137 = arith.negf %136 : vector<8x128xf32>
    %138 = math.exp %137 : vector<8x128xf32>
    %cst_64 = arith.constant 1.000000e+00 : f32
    %139 = vector.broadcast %cst_64 : f32 to vector<8x128xf32>
    %140 = arith.addf %139, %138 : vector<8x128xf32>
    %141 = arith.divf %139, %140 : vector<8x128xf32>
    %cst_65 = arith.constant dense<0.000000e+00> : vector<8x256xf32>
    %142 = tpu.matmul %141, %3, %cst_65 {dimension_numbers = #tpu.dot_dimension_numbers<[1], [0], [0], [1], [0, 0, 1, 1], [], []>} : vector<8x128xf32>, vector<128x256xf32>, vector<8x256xf32> -> vector<8x256xf32>
    %143 = vector.extract_strided_slice %142 {offsets = [0, 0], sizes = [8, 128], strides = [1, 1]} : vector<8x256xf32> to vector<8x128xf32>
    %144 = vector.extract_strided_slice %142 {offsets = [0, 128], sizes = [8, 128], strides = [1, 1]} : vector<8x256xf32> to vector<8x128xf32>
    %145 = vector.broadcast %4 : vector<1x128xf32> to vector<8x128xf32>
    %146 = arith.addf %144, %145 : vector<8x128xf32>
    %c8_66 = arith.constant 8 : index
    %c0_67 = arith.constant 0 : index
    %c0_68 = arith.constant 0 : index
    %147 = vector.load %arg4[%c8_66, %c0_67, %c0_68] : memref<16x8x128xf32, #tpu.memory_space<vmem>>, vector<1x8x128xf32>
    %148 = vector.shape_cast %147 : vector<1x8x128xf32> to vector<8x128xf32>
    %149 = vector.shape_cast %146 : vector<8x128xf32> to vector<1x8x128xf32>
    tpu.vector_store %arg4[%c8_66, %c0_67, %c0_68], %149 {strides = array<i32>} : memref<16x8x128xf32, #tpu.memory_space<vmem>>, vector<1x8x128xf32>,
    %c9 = arith.constant 9 : index
    %c0_69 = arith.constant 0 : index
    %c0_70 = arith.constant 0 : index
    %150 = vector.load %arg1[%c9, %c0_69, %c0_70] : memref<16x8x128xf32, #tpu.memory_space<vmem>>, vector<1x8x128xf32>
    %151 = vector.shape_cast %150 : vector<1x8x128xf32> to vector<8x128xf32>
    %152 = arith.addf %143, %151 : vector<8x128xf32>
    %153 = arith.negf %152 : vector<8x128xf32>
    %154 = math.exp %153 : vector<8x128xf32>
    %cst_71 = arith.constant 1.000000e+00 : f32
    %155 = vector.broadcast %cst_71 : f32 to vector<8x128xf32>
    %156 = arith.addf %155, %154 : vector<8x128xf32>
    %157 = arith.divf %155, %156 : vector<8x128xf32>
    %cst_72 = arith.constant dense<0.000000e+00> : vector<8x256xf32>
    %158 = tpu.matmul %157, %3, %cst_72 {dimension_numbers = #tpu.dot_dimension_numbers<[1], [0], [0], [1], [0, 0, 1, 1], [], []>} : vector<8x128xf32>, vector<128x256xf32>, vector<8x256xf32> -> vector<8x256xf32>
    %159 = vector.extract_strided_slice %158 {offsets = [0, 0], sizes = [8, 128], strides = [1, 1]} : vector<8x256xf32> to vector<8x128xf32>
    %160 = vector.extract_strided_slice %158 {offsets = [0, 128], sizes = [8, 128], strides = [1, 1]} : vector<8x256xf32> to vector<8x128xf32>
    %161 = vector.broadcast %4 : vector<1x128xf32> to vector<8x128xf32>
    %162 = arith.addf %160, %161 : vector<8x128xf32>
    %c9_73 = arith.constant 9 : index
    %c0_74 = arith.constant 0 : index
    %c0_75 = arith.constant 0 : index
    %163 = vector.load %arg4[%c9_73, %c0_74, %c0_75] : memref<16x8x128xf32, #tpu.memory_space<vmem>>, vector<1x8x128xf32>
    %164 = vector.shape_cast %163 : vector<1x8x128xf32> to vector<8x128xf32>
    %165 = vector.shape_cast %162 : vector<8x128xf32> to vector<1x8x128xf32>
    tpu.vector_store %arg4[%c9_73, %c0_74, %c0_75], %165 {strides = array<i32>} : memref<16x8x128xf32, #tpu.memory_space<vmem>>, vector<1x8x128xf32>,
    %c10 = arith.constant 10 : index
    %c0_76 = arith.constant 0 : index
    %c0_77 = arith.constant 0 : index
    %166 = vector.load %arg1[%c10, %c0_76, %c0_77] : memref<16x8x128xf32, #tpu.memory_space<vmem>>, vector<1x8x128xf32>
    %167 = vector.shape_cast %166 : vector<1x8x128xf32> to vector<8x128xf32>
    %168 = arith.addf %159, %167 : vector<8x128xf32>
    %169 = arith.negf %168 : vector<8x128xf32>
    %170 = math.exp %169 : vector<8x128xf32>
    %cst_78 = arith.constant 1.000000e+00 : f32
    %171 = vector.broadcast %cst_78 : f32 to vector<8x128xf32>
    %172 = arith.addf %171, %170 : vector<8x128xf32>
    %173 = arith.divf %171, %172 : vector<8x128xf32>
    %cst_79 = arith.constant dense<0.000000e+00> : vector<8x256xf32>
    %174 = tpu.matmul %173, %3, %cst_79 {dimension_numbers = #tpu.dot_dimension_numbers<[1], [0], [0], [1], [0, 0, 1, 1], [], []>} : vector<8x128xf32>, vector<128x256xf32>, vector<8x256xf32> -> vector<8x256xf32>
    %175 = vector.extract_strided_slice %174 {offsets = [0, 0], sizes = [8, 128], strides = [1, 1]} : vector<8x256xf32> to vector<8x128xf32>
    %176 = vector.extract_strided_slice %174 {offsets = [0, 128], sizes = [8, 128], strides = [1, 1]} : vector<8x256xf32> to vector<8x128xf32>
    %177 = vector.broadcast %4 : vector<1x128xf32> to vector<8x128xf32>
    %178 = arith.addf %176, %177 : vector<8x128xf32>
    %c10_80 = arith.constant 10 : index
    %c0_81 = arith.constant 0 : index
    %c0_82 = arith.constant 0 : index
    %179 = vector.load %arg4[%c10_80, %c0_81, %c0_82] : memref<16x8x128xf32, #tpu.memory_space<vmem>>, vector<1x8x128xf32>
    %180 = vector.shape_cast %179 : vector<1x8x128xf32> to vector<8x128xf32>
    %181 = vector.shape_cast %178 : vector<8x128xf32> to vector<1x8x128xf32>
    tpu.vector_store %arg4[%c10_80, %c0_81, %c0_82], %181 {strides = array<i32>} : memref<16x8x128xf32, #tpu.memory_space<vmem>>, vector<1x8x128xf32>,
    %c11 = arith.constant 11 : index
    %c0_83 = arith.constant 0 : index
    %c0_84 = arith.constant 0 : index
    %182 = vector.load %arg1[%c11, %c0_83, %c0_84] : memref<16x8x128xf32, #tpu.memory_space<vmem>>, vector<1x8x128xf32>
    %183 = vector.shape_cast %182 : vector<1x8x128xf32> to vector<8x128xf32>
    %184 = arith.addf %175, %183 : vector<8x128xf32>
    %185 = arith.negf %184 : vector<8x128xf32>
    %186 = math.exp %185 : vector<8x128xf32>
    %cst_85 = arith.constant 1.000000e+00 : f32
    %187 = vector.broadcast %cst_85 : f32 to vector<8x128xf32>
    %188 = arith.addf %187, %186 : vector<8x128xf32>
    %189 = arith.divf %187, %188 : vector<8x128xf32>
    %cst_86 = arith.constant dense<0.000000e+00> : vector<8x256xf32>
    %190 = tpu.matmul %189, %3, %cst_86 {dimension_numbers = #tpu.dot_dimension_numbers<[1], [0], [0], [1], [0, 0, 1, 1], [], []>} : vector<8x128xf32>, vector<128x256xf32>, vector<8x256xf32> -> vector<8x256xf32>
    %191 = vector.extract_strided_slice %190 {offsets = [0, 0], sizes = [8, 128], strides = [1, 1]} : vector<8x256xf32> to vector<8x128xf32>
    %192 = vector.extract_strided_slice %190 {offsets = [0, 128], sizes = [8, 128], strides = [1, 1]} : vector<8x256xf32> to vector<8x128xf32>
    %193 = vector.broadcast %4 : vector<1x128xf32> to vector<8x128xf32>
    %194 = arith.addf %192, %193 : vector<8x128xf32>
    %c11_87 = arith.constant 11 : index
    %c0_88 = arith.constant 0 : index
    %c0_89 = arith.constant 0 : index
    %195 = vector.load %arg4[%c11_87, %c0_88, %c0_89] : memref<16x8x128xf32, #tpu.memory_space<vmem>>, vector<1x8x128xf32>
    %196 = vector.shape_cast %195 : vector<1x8x128xf32> to vector<8x128xf32>
    %197 = vector.shape_cast %194 : vector<8x128xf32> to vector<1x8x128xf32>
    tpu.vector_store %arg4[%c11_87, %c0_88, %c0_89], %197 {strides = array<i32>} : memref<16x8x128xf32, #tpu.memory_space<vmem>>, vector<1x8x128xf32>,
    %c12 = arith.constant 12 : index
    %c0_90 = arith.constant 0 : index
    %c0_91 = arith.constant 0 : index
    %198 = vector.load %arg1[%c12, %c0_90, %c0_91] : memref<16x8x128xf32, #tpu.memory_space<vmem>>, vector<1x8x128xf32>
    %199 = vector.shape_cast %198 : vector<1x8x128xf32> to vector<8x128xf32>
    %200 = arith.addf %191, %199 : vector<8x128xf32>
    %201 = arith.negf %200 : vector<8x128xf32>
    %202 = math.exp %201 : vector<8x128xf32>
    %cst_92 = arith.constant 1.000000e+00 : f32
    %203 = vector.broadcast %cst_92 : f32 to vector<8x128xf32>
    %204 = arith.addf %203, %202 : vector<8x128xf32>
    %205 = arith.divf %203, %204 : vector<8x128xf32>
    %cst_93 = arith.constant dense<0.000000e+00> : vector<8x256xf32>
    %206 = tpu.matmul %205, %3, %cst_93 {dimension_numbers = #tpu.dot_dimension_numbers<[1], [0], [0], [1], [0, 0, 1, 1], [], []>} : vector<8x128xf32>, vector<128x256xf32>, vector<8x256xf32> -> vector<8x256xf32>
    %207 = vector.extract_strided_slice %206 {offsets = [0, 0], sizes = [8, 128], strides = [1, 1]} : vector<8x256xf32> to vector<8x128xf32>
    %208 = vector.extract_strided_slice %206 {offsets = [0, 128], sizes = [8, 128], strides = [1, 1]} : vector<8x256xf32> to vector<8x128xf32>
    %209 = vector.broadcast %4 : vector<1x128xf32> to vector<8x128xf32>
    %210 = arith.addf %208, %209 : vector<8x128xf32>
    %c12_94 = arith.constant 12 : index
    %c0_95 = arith.constant 0 : index
    %c0_96 = arith.constant 0 : index
    %211 = vector.load %arg4[%c12_94, %c0_95, %c0_96] : memref<16x8x128xf32, #tpu.memory_space<vmem>>, vector<1x8x128xf32>
    %212 = vector.shape_cast %211 : vector<1x8x128xf32> to vector<8x128xf32>
    %213 = vector.shape_cast %210 : vector<8x128xf32> to vector<1x8x128xf32>
    tpu.vector_store %arg4[%c12_94, %c0_95, %c0_96], %213 {strides = array<i32>} : memref<16x8x128xf32, #tpu.memory_space<vmem>>, vector<1x8x128xf32>,
    %c13 = arith.constant 13 : index
    %c0_97 = arith.constant 0 : index
    %c0_98 = arith.constant 0 : index
    %214 = vector.load %arg1[%c13, %c0_97, %c0_98] : memref<16x8x128xf32, #tpu.memory_space<vmem>>, vector<1x8x128xf32>
    %215 = vector.shape_cast %214 : vector<1x8x128xf32> to vector<8x128xf32>
    %216 = arith.addf %207, %215 : vector<8x128xf32>
    %217 = arith.negf %216 : vector<8x128xf32>
    %218 = math.exp %217 : vector<8x128xf32>
    %cst_99 = arith.constant 1.000000e+00 : f32
    %219 = vector.broadcast %cst_99 : f32 to vector<8x128xf32>
    %220 = arith.addf %219, %218 : vector<8x128xf32>
    %221 = arith.divf %219, %220 : vector<8x128xf32>
    %cst_100 = arith.constant dense<0.000000e+00> : vector<8x256xf32>
    %222 = tpu.matmul %221, %3, %cst_100 {dimension_numbers = #tpu.dot_dimension_numbers<[1], [0], [0], [1], [0, 0, 1, 1], [], []>} : vector<8x128xf32>, vector<128x256xf32>, vector<8x256xf32> -> vector<8x256xf32>
    %223 = vector.extract_strided_slice %222 {offsets = [0, 0], sizes = [8, 128], strides = [1, 1]} : vector<8x256xf32> to vector<8x128xf32>
    %224 = vector.extract_strided_slice %222 {offsets = [0, 128], sizes = [8, 128], strides = [1, 1]} : vector<8x256xf32> to vector<8x128xf32>
    %225 = vector.broadcast %4 : vector<1x128xf32> to vector<8x128xf32>
    %226 = arith.addf %224, %225 : vector<8x128xf32>
    %c13_101 = arith.constant 13 : index
    %c0_102 = arith.constant 0 : index
    %c0_103 = arith.constant 0 : index
    %227 = vector.load %arg4[%c13_101, %c0_102, %c0_103] : memref<16x8x128xf32, #tpu.memory_space<vmem>>, vector<1x8x128xf32>
    %228 = vector.shape_cast %227 : vector<1x8x128xf32> to vector<8x128xf32>
    %229 = vector.shape_cast %226 : vector<8x128xf32> to vector<1x8x128xf32>
    tpu.vector_store %arg4[%c13_101, %c0_102, %c0_103], %229 {strides = array<i32>} : memref<16x8x128xf32, #tpu.memory_space<vmem>>, vector<1x8x128xf32>,
    %c14 = arith.constant 14 : index
    %c0_104 = arith.constant 0 : index
    %c0_105 = arith.constant 0 : index
    %230 = vector.load %arg1[%c14, %c0_104, %c0_105] : memref<16x8x128xf32, #tpu.memory_space<vmem>>, vector<1x8x128xf32>
    %231 = vector.shape_cast %230 : vector<1x8x128xf32> to vector<8x128xf32>
    %232 = arith.addf %223, %231 : vector<8x128xf32>
    %233 = arith.negf %232 : vector<8x128xf32>
    %234 = math.exp %233 : vector<8x128xf32>
    %cst_106 = arith.constant 1.000000e+00 : f32
    %235 = vector.broadcast %cst_106 : f32 to vector<8x128xf32>
    %236 = arith.addf %235, %234 : vector<8x128xf32>
    %237 = arith.divf %235, %236 : vector<8x128xf32>
    %cst_107 = arith.constant dense<0.000000e+00> : vector<8x256xf32>
    %238 = tpu.matmul %237, %3, %cst_107 {dimension_numbers = #tpu.dot_dimension_numbers<[1], [0], [0], [1], [0, 0, 1, 1], [], []>} : vector<8x128xf32>, vector<128x256xf32>, vector<8x256xf32> -> vector<8x256xf32>
    %239 = vector.extract_strided_slice %238 {offsets = [0, 0], sizes = [8, 128], strides = [1, 1]} : vector<8x256xf32> to vector<8x128xf32>
    %240 = vector.extract_strided_slice %238 {offsets = [0, 128], sizes = [8, 128], strides = [1, 1]} : vector<8x256xf32> to vector<8x128xf32>
    %241 = vector.broadcast %4 : vector<1x128xf32> to vector<8x128xf32>
    %242 = arith.addf %240, %241 : vector<8x128xf32>
    %c14_108 = arith.constant 14 : index
    %c0_109 = arith.constant 0 : index
    %c0_110 = arith.constant 0 : index
    %243 = vector.load %arg4[%c14_108, %c0_109, %c0_110] : memref<16x8x128xf32, #tpu.memory_space<vmem>>, vector<1x8x128xf32>
    %244 = vector.shape_cast %243 : vector<1x8x128xf32> to vector<8x128xf32>
    %245 = vector.shape_cast %242 : vector<8x128xf32> to vector<1x8x128xf32>
    tpu.vector_store %arg4[%c14_108, %c0_109, %c0_110], %245 {strides = array<i32>} : memref<16x8x128xf32, #tpu.memory_space<vmem>>, vector<1x8x128xf32>,
    %c15 = arith.constant 15 : index
    %c0_111 = arith.constant 0 : index
    %c0_112 = arith.constant 0 : index
    %246 = vector.load %arg1[%c15, %c0_111, %c0_112] : memref<16x8x128xf32, #tpu.memory_space<vmem>>, vector<1x8x128xf32>
    %247 = vector.shape_cast %246 : vector<1x8x128xf32> to vector<8x128xf32>
    %248 = arith.addf %239, %247 : vector<8x128xf32>
    %249 = arith.negf %248 : vector<8x128xf32>
    %250 = math.exp %249 : vector<8x128xf32>
    %cst_113 = arith.constant 1.000000e+00 : f32
    %251 = vector.broadcast %cst_113 : f32 to vector<8x128xf32>
    %252 = arith.addf %251, %250 : vector<8x128xf32>
    %253 = arith.divf %251, %252 : vector<8x128xf32>
    %cst_114 = arith.constant dense<0.000000e+00> : vector<8x256xf32>
    %254 = tpu.matmul %253, %3, %cst_114 {dimension_numbers = #tpu.dot_dimension_numbers<[1], [0], [0], [1], [0, 0, 1, 1], [], []>} : vector<8x128xf32>, vector<128x256xf32>, vector<8x256xf32> -> vector<8x256xf32>
    %255 = vector.extract_strided_slice %254 {offsets = [0, 0], sizes = [8, 128], strides = [1, 1]} : vector<8x256xf32> to vector<8x128xf32>
    %256 = vector.extract_strided_slice %254 {offsets = [0, 128], sizes = [8, 128], strides = [1, 1]} : vector<8x256xf32> to vector<8x128xf32>
    %257 = vector.broadcast %4 : vector<1x128xf32> to vector<8x128xf32>
    %258 = arith.addf %256, %257 : vector<8x128xf32>
    %c15_115 = arith.constant 15 : index
    %c0_116 = arith.constant 0 : index
    %c0_117 = arith.constant 0 : index
    %259 = vector.load %arg4[%c15_115, %c0_116, %c0_117] : memref<16x8x128xf32, #tpu.memory_space<vmem>>, vector<1x8x128xf32>
    %260 = vector.shape_cast %259 : vector<1x8x128xf32> to vector<8x128xf32>
    %261 = vector.shape_cast %258 : vector<8x128xf32> to vector<1x8x128xf32>
    tpu.vector_store %arg4[%c15_115, %c0_116, %c0_117], %261 {strides = array<i32>} : memref<16x8x128xf32, #tpu.memory_space<vmem>>, vector<1x8x128xf32>,
    %c0_118 = arith.constant 0 : index
    %c0_119 = arith.constant 0 : index
    %262 = vector.load %arg5[%c0_118, %c0_119] : memref<8x128xf32, #tpu.memory_space<vmem>>, vector<8x128xf32>
    tpu.vector_store %arg5[%c0_118, %c0_119], %255 {strides = array<i32>} : memref<8x128xf32, #tpu.memory_space<vmem>>, vector<8x128xf32>,
    return
  }
  func.func @transform_0(%arg0: i32) -> (i32, i32, i32) {
    %c0_i32 = arith.constant 0 : i32
    %c0_i32_0 = arith.constant 0 : i32
    %c0_i32_1 = arith.constant 0 : i32
    return %arg0, %c0_i32, %c0_i32_0 : i32, i32, i32
  }
  func.func @transform_1(%arg0: i32) -> (i32, i32) {
    %c0_i32 = arith.constant 0 : i32
    %c0_i32_0 = arith.constant 0 : i32
    %c0_i32_1 = arith.constant 0 : i32
    return %c0_i32, %c0_i32_0 : i32, i32
  }
  func.func @transform_2(%arg0: i32) -> (i32, i32) {
    %c0_i32 = arith.constant 0 : i32
    %c0_i32_0 = arith.constant 0 : i32
    %c0_i32_1 = arith.constant 0 : i32
    return %c0_i32, %c0_i32_0 : i32, i32
  }
  func.func @transform_3(%arg0: i32) -> (i32, i32, i32) {
    %c0_i32 = arith.constant 0 : i32
    %c0_i32_0 = arith.constant 0 : i32
    %c0_i32_1 = arith.constant 0 : i32
    return %arg0, %c0_i32, %c0_i32_0 : i32, i32, i32
  }
}

</mosaic_0001>

<llo_original>
// kernel: tpu_custom_call.1
$region0: #{tpu_custom_call.1}
  #allocation0 [shape = 'u32[]', space=smem, size = 0x4, offset = 0x4, fixed_abs, tag = 'smem constant byte address 0x4 - core index']
  #allocation1 [shape = 'u32[144,128]{1,0:T(1,128)}', space=vmem, size = 0x12000, scoped, tag = 'internal scratch']
  #allocation2 [shape = 'f32[8,128]{1,0:T(8,128)}', space=vmem, size = 0x1000, scoped, tag = 'scratch operand']
  %s0 = inlined_call_operand.hbm [shape: f32[64,8,128], index: 0, kind: input, shape index: {}]
  %s1 = inlined_call_operand.hbm [shape: f32[128,256], index: 1, kind: input, shape index: {}]
  %s2 = inlined_call_operand.vmem [shape: f32[1,128], index: 2, kind: input, shape index: {}]
  %s3 = inlined_call_operand.hbm [shape: f32[64,8,128], index: 3, kind: output, shape index: {}]
  %s4 = sld [smem:[#allocation0]]
  $region57: #{tpu_custom_call.1} parent=0
    _
  %s6 = ssub.s32 1, %s4
  %s7 = scalar_select 0, %s6, %s4
  $region1: #{tpu_custom_call.1} parent=0
    #allocation3 [shape = 'u8[131072]{0}', space=vmem, size = 0x20000, scoped, tag = 'input window, operand 0']
    #allocation4 [shape = 's32[2]{0}', space=sflag, size = 0x8, scoped, tag = 'scoped memory for tpu_custom_call.1']
    #allocation5 [shape = 's32[2]{0}', space=sflag, size = 0x8, scoped, tag = 'scoped memory for tpu_custom_call.1']
    #allocation6 [shape = 'u8[131072]{0}', space=vmem, size = 0x20000, scoped, tag = 'input window, operand 1, single buffered']
    #allocation7 [shape = 's32[1]{0}', space=sflag, size = 0x4, scoped, tag = 'scoped memory for tpu_custom_call.1']
    #allocation8 [shape = 'u8[131072]{0}', space=vmem, size = 0x20000, scoped, tag = 'output window, operand 0']
    %8 = vsyncpa [#allocation4], 0
    %s9 = scalar_lea.sflag [#allocation4], 1
    %10 = vsyncpa %s9, 0
    %11 = vsyncpa [#allocation7], 0
    %12 = vsyncpa [#allocation5], 0
    %s13 = scalar_lea.sflag [#allocation5], 1
    %14 = vsyncpa %s13, 0
    loop: start=0, step=1, limit=6
    $region2: #{tpu_custom_call.1} parent=1 // loop_pre_header
      _
    $region3: #{tpu_custom_call.1} parent=1 // loop_header
      %s16 = sphi 0, %s20
      %p17 = scmp.ge.s32.totalorder %s16, 6
      %s26 = sphi 0, %s28
      %s29 = sphi 0, %s26
      %s30 = sphi 0, %s29
      %s46 = sphi 0, %s30
      %s50 = sphi 0, %s50
      %s52 = sphi 0, %s50
      %s53 = sphi 0, %s52
      %s67 = sphi 0, %s53
      %s71 = sphi 0, %s71
      %s73 = sphi 0, %s71
      %s74 = sphi 0, %s73
      %s88 = sphi 0, %s74
      %s94 = sphi 0, %s96
      %s97 = sphi 0, %s94
      %s98 = sphi 0, %s97
      %s114 = sphi 0, %s98
    $region4: #{tpu_custom_call.1} parent=1 // loop_header_branch
      %19 = sbr.rel (%p17) target = $region8
    $region5: #{tpu_custom_call.1} parent=1 // loop_body
      %s21 = ssub.s32 %s16, 1
      %s22 = ssub.s32 %s16, 2
      %s23 = sadd.s32 %s16, 1
      %s24 = ssub.s32 %s16, %s23
      %p25 = scmp.eq.s32.totalorder %s24, 0
      %s27 = sadd.s32 %s26, 1
      %s28 = scalar_select %p25, %s26, %s27
      %p31 = pneg %p25
      %p32 = scmp.eq.s32.totalorder %s16, 3
      %p33 = por %p31, %p32
      %p34 = scmp.ne.s32.totalorder %s26, %s29
      %p35 = scmp.eq.s32.totalorder %s16, 0
      %p36 = por %p34, %p35
      %p37 = scmp.ne.s32.totalorder %s26, %s29
      %p38 = scmp.eq.s32.totalorder %s21, 3
      %p39 = por %p37, %p38
      %p40 = scmp.ne.s32.totalorder %s29, %s30
      %p41 = scmp.eq.s32.totalorder %s21, 0
      %p42 = por %p40, %p41
      %p43 = scmp.ne.s32.totalorder %s29, %s30
      %p44 = scmp.eq.s32.totalorder %s22, 3
      %p45 = por %p43, %p44
      %p47 = scmp.ne.s32.totalorder %s30, %s46
      %p48 = scmp.eq.s32.totalorder %s22, 0
      %p49 = por %p47, %p48
      %s51 = sadd.s32 %s50, 1
      %p54 = scmp.eq.s32.totalorder %s16, 3
      %p55 = scmp.ne.s32.totalorder %s50, %s52
      %p56 = scmp.eq.s32.totalorder %s16, 0
      %p57 = por %p55, %p56
      %p58 = scmp.ne.s32.totalorder %s50, %s52
      %p59 = scmp.eq.s32.totalorder %s21, 3
      %p60 = por %p58, %p59
      %p61 = scmp.ne.s32.totalorder %s52, %s53
      %p62 = scmp.eq.s32.totalorder %s21, 0
      %p63 = por %p61, %p62
      %p64 = scmp.ne.s32.totalorder %s52, %s53
      %p65 = scmp.eq.s32.totalorder %s22, 3
      %p66 = por %p64, %p65
      %p68 = scmp.ne.s32.totalorder %s53, %s67
      %p69 = scmp.eq.s32.totalorder %s22, 0
      %p70 = por %p68, %p69
      %s72 = sadd.s32 %s71, 1
      %p75 = scmp.eq.s32.totalorder %s16, 3
      %p76 = scmp.ne.s32.totalorder %s71, %s73
      %p77 = scmp.eq.s32.totalorder %s16, 0
      %p78 = por %p76, %p77
      %p79 = scmp.ne.s32.totalorder %s71, %s73
      %p80 = scmp.eq.s32.totalorder %s21, 3
      %p81 = por %p79, %p80
      %p82 = scmp.ne.s32.totalorder %s73, %s74
      %p83 = scmp.eq.s32.totalorder %s21, 0
      %p84 = por %p82, %p83
      %p85 = scmp.ne.s32.totalorder %s73, %s74
      %p86 = scmp.eq.s32.totalorder %s22, 3
      %p87 = por %p85, %p86
      %p89 = scmp.ne.s32.totalorder %s74, %s88
      %p90 = scmp.eq.s32.totalorder %s22, 0
      %p91 = por %p89, %p90
      %s92 = ssub.s32 %s16, %s23
      %p93 = scmp.eq.s32.totalorder %s92, 0
      %s95 = sadd.s32 %s94, 1
      %s96 = scalar_select %p93, %s94, %s95
      %p99 = pneg %p93
      %p100 = scmp.eq.s32.totalorder %s16, 3
      %p101 = por %p99, %p100
      %p102 = scmp.ne.s32.totalorder %s94, %s97
      %p103 = scmp.eq.s32.totalorder %s16, 0
      %p104 = por %p102, %p103
      %p105 = scmp.ne.s32.totalorder %s94, %s97
      %p106 = scmp.eq.s32.totalorder %s21, 3
      %p107 = por %p105, %p106
      %p108 = scmp.ne.s32.totalorder %s97, %s98
      %p109 = scmp.eq.s32.totalorder %s21, 0
      %p110 = por %p108, %p109
      %p111 = scmp.ne.s32.totalorder %s97, %s98
      %p112 = scmp.eq.s32.totalorder %s22, 3
      %p113 = por %p111, %p112
      %p115 = scmp.ne.s32.totalorder %s98, %s114
      %p116 = scmp.eq.s32.totalorder %s22, 0
      %p117 = por %p115, %p116
      %p118 = scmp.le.s32.totalorder 1, %s16
      %p119 = scmp.lt.s32.totalorder %s16, 5
      %p120 = pnand %p118, %p119
      %p121 = pneg %p120
      // Predicated region
      $region9: #{tpu_custom_call.1} parent=5 // pred_check
        _
      $region10: #{tpu_custom_call.1} parent=5 // pred_check_branch
        %123 = sbr.rel (%p120) target = $region12
      $region11: #{tpu_custom_call.1} parent=5 // pred_region
        %s124 = ssub.s32 %s16, 1
        // Predicated region
        $region13: #{tpu_custom_call.1} parent=11 // pred_check
          %p125 = pneg %p63
        $region14: #{tpu_custom_call.1} parent=11 // pred_check_branch
          %127 = sbr.rel (%p125) target = $region16
        $region15: #{tpu_custom_call.1} parent=11 // pred_region
          %s129 = ssub.s32 4096, 4096
          %130 = vsyncadd [#allocation7], %s129
          %s131 = sshll.u32 [#allocation6], 4
          %s132 = int_to_ptr.vmem [resolvable:$true] %s131
          %137 = dma.hbm_to_vmem [thread:$0]  %s1, 4096, %s132, [#allocation7], 256, 256, 16
        $region16: #{tpu_custom_call.1} parent=11 // pred_fallthru
          _
        // Predicated region
        $region17: #{tpu_custom_call.1} parent=11 // pred_check
          %p138 = pneg %p84
        $region18: #{tpu_custom_call.1} parent=11 // pred_check_branch
          %140 = sbr.rel (%p138) target = $region20
        $region19: #{tpu_custom_call.1} parent=11 // pred_region
          _
        $region20: #{tpu_custom_call.1} parent=11 // pred_fallthru
          _
      $region12: #{tpu_custom_call.1} parent=5 // pred_fallthru
        _
      %p141 = scmp.lt.s32.totalorder %s16, 4
      // Predicated region
      $region21: #{tpu_custom_call.1} parent=5 // pred_check
        %p142 = pneg %p141
      $region22: #{tpu_custom_call.1} parent=5 // pred_check_branch
        %144 = sbr.rel (%p142) target = $region24
      $region23: #{tpu_custom_call.1} parent=5 // pred_region
        // Predicated region
        $region25: #{tpu_custom_call.1} parent=23 // pred_check
          %p145 = pneg %p36
        $region26: #{tpu_custom_call.1} parent=23 // pred_check_branch
          %147 = sbr.rel (%p145) target = $region28
        $region27: #{tpu_custom_call.1} parent=23 // pred_region
          %s148 = sand.u32 %s26, 1
          %s149 = scalar_lea.sflag [#allocation4], %s148
          %s150 = sand.u32 %s26, 1
          %s151 = smul.addr %s150, 128
          %s152 = scalar_lea.vmem [#allocation3], %s151
          %s153 = smul.u32 16, %s16
          %s155 = ssub.s32 2048, 2048
          %156 = vsyncadd %s149, %s155
          %s157 = smul.addr %s153, 128
          %s158 = scalar_lea.hbm %s0, %s157
          %s159 = sshll.u32 %s152, 4
          %s160 = int_to_ptr.vmem [resolvable:$true] %s159
          %165 = dma.hbm_to_vmem [thread:$0]  %s158, 2048, %s160, %s149, 128, 128, 8
        $region28: #{tpu_custom_call.1} parent=23 // pred_fallthru
          _
      $region24: #{tpu_custom_call.1} parent=5 // pred_fallthru
        _
      %p166 = scmp.le.s32.totalorder 1, %s16
      %p167 = scmp.lt.s32.totalorder %s16, 5
      %p168 = pnand %p166, %p167
      %p169 = pneg %p168
      // Predicated region
      $region29: #{tpu_custom_call.1} parent=5 // pred_check
        _
      $region30: #{tpu_custom_call.1} parent=5 // pred_check_branch
        %171 = sbr.rel (%p168) target = $region32
      $region31: #{tpu_custom_call.1} parent=5 // pred_region
        %s172 = ssub.s32 %s16, 1
        %s173 = sand.u32 %s29, 1
        %s174 = scalar_lea.sflag [#allocation4], %s173
        %s175 = sand.u32 %s29, 1
        %s176 = smul.addr %s175, 128
        %s177 = scalar_lea.vmem [#allocation3], %s176
        // Predicated region
        $region33: #{tpu_custom_call.1} parent=31 // pred_check
          %p178 = pneg %p42
        $region34: #{tpu_custom_call.1} parent=31 // pred_check_branch
          %180 = sbr.rel (%p178) target = $region36
        $region35: #{tpu_custom_call.1} parent=31 // pred_region
          %181 = dma.done %s174, 2048
        $region36: #{tpu_custom_call.1} parent=31 // pred_fallthru
          _
        // Predicated region
        $region37: #{tpu_custom_call.1} parent=31 // pred_check
          %p182 = pneg %p63
        $region38: #{tpu_custom_call.1} parent=31 // pred_check_branch
          %184 = sbr.rel (%p182) target = $region40
        $region39: #{tpu_custom_call.1} parent=31 // pred_region
          %185 = dma.done [#allocation7], 4096
        $region40: #{tpu_custom_call.1} parent=31 // pred_fallthru
          _
        %s186 = sand.u32 %s29, 1
        %s187 = scalar_lea.sflag [#allocation4], %s186
        %s188 = sand.u32 %s29, 1
        %s189 = smul.addr %s188, 128
        %s190 = scalar_lea.vmem [#allocation3], %s189
        %p191 = pneg %p42
        %p192 = pneg %p39
        %p193 = pneg %p63
        %p194 = pneg %p60
        %p195 = pneg %p84
        %p196 = pneg %p81
        %p197 = pneg %p110
        %p198 = pneg %p107
        %s199 = sand.u32 %s97, 1
        %s200 = scalar_lea.sflag [#allocation5], %s199
        %s201 = sand.u32 %s97, 1
        %s202 = smul.addr %s201, 128
        %s203 = scalar_lea.vmem [#allocation8], %s202
        %s204 = smul.u32 16, %s21
        %s205 = smul.u32 16, %s21
        %p206 = scmp.eq.s32.totalorder %s21, 0
        // Predicated region
        $region41: #{tpu_custom_call.1} parent=31 // pred_check
          %p207 = pneg %p206
        $region42: #{tpu_custom_call.1} parent=31 // pred_check_branch
          %209 = sbr.rel (%p207) target = $region44
        $region43: #{tpu_custom_call.1} parent=31 // pred_region
          %210 = vst [vmem:[#allocation2] sm:$0xff] 0.0
        $region44: #{tpu_custom_call.1} parent=31 // pred_fallthru
          _
        %v211 = vld [vmem:[#allocation6] sm:$0xff]
        %v212 = vld [vmem:[#allocation6 + $0x8] sm:$0xff]
        %v213 = vld [vmem:[#allocation6 + $0x10] sm:$0xff]
        %v214 = vld [vmem:[#allocation6 + $0x18] sm:$0xff]
        %v215 = vld [vmem:[#allocation6 + $0x20] sm:$0xff]
        %v216 = vld [vmem:[#allocation6 + $0x28] sm:$0xff]
        %v217 = vld [vmem:[#allocation6 + $0x30] sm:$0xff]
        %v218 = vld [vmem:[#allocation6 + $0x38] sm:$0xff]
        %v219 = vld [vmem:[#allocation6 + $0x40] sm:$0xff]
        %v220 = vld [vmem:[#allocation6 + $0x48] sm:$0xff]
        %v221 = vld [vmem:[#allocation6 + $0x50] sm:$0xff]
        %v222 = vld [vmem:[#allocation6 + $0x58] sm:$0xff]
        %v223 = vld [vmem:[#allocation6 + $0x60] sm:$0xff]
        %v224 = vld [vmem:[#allocation6 + $0x68] sm:$0xff]
        %v225 = vld [vmem:[#allocation6 + $0x70] sm:$0xff]
        %v226 = vld [vmem:[#allocation6 + $0x78] sm:$0xff]
        %v227 = vld [vmem:[#allocation6 + $0x80] sm:$0xff]
        %v228 = vld [vmem:[#allocation6 + $0x88] sm:$0xff]
        %v229 = vld [vmem:[#allocation6 + $0x90] sm:$0xff]
        %v230 = vld [vmem:[#allocation6 + $0x98] sm:$0xff]
        %v231 = vld [vmem:[#allocation6 + $0xa0] sm:$0xff]
        %v232 = vld [vmem:[#allocation6 + $0xa8] sm:$0xff]
        %v233 = vld [vmem:[#allocation6 + $0xb0] sm:$0xff]
        %v234 = vld [vmem:[#allocation6 + $0xb8] sm:$0xff]
        %v235 = vld [vmem:[#allocation6 + $0xc0] sm:$0xff]
        %v236 = vld [vmem:[#allocation6 + $0xc8] sm:$0xff]
        %v237 = vld [vmem:[#allocation6 + $0xd0] sm:$0xff]
        %v238 = vld [vmem:[#allocation6 + $0xd8] sm:$0xff]
        %v239 = vld [vmem:[#allocation6 + $0xe0] sm:$0xff]
        %v240 = vld [vmem:[#allocation6 + $0xe8] sm:$0xff]
        %v241 = vld [vmem:[#allocation6 + $0xf0] sm:$0xff]
        %v242 = vld [vmem:[#allocation6 + $0xf8] sm:$0xff]
        %v243 = vld [vmem:[%s2] sm:$0x1]
        %v244 = vld [vmem:[#allocation2] sm:$0xff]
        %v245 = vld [vmem:[%s177] sm:$0xff]
        %v246 = vadd.f32 %v244, %v245
        %v247 = vxor.u32 %v246, 2147483648
        %v248 = vmul.f32 %v247, 1.442695
        %v249 = vpow.pop %v248
        %v250 = vadd.f32 %v249, 1.0
        %v251 = vrcp.pop %v250
        %v252 = vmul.f32 1.0, %v251
        %253 = vmatprep.subr.mxu0 %v212
        %254 = vmatpush1.msra.mxu0 %v211
        %255 = vmatprep.subr.mxu0 %v214
        %256 = vmatpush1.msra.mxu0 %v213
        %257 = vmatprep.subr.mxu0 %v216
        %258 = vmatpush1.msra.mxu0 %v215
        %259 = vmatprep.subr.mxu0 %v218
        %260 = vmatpush1.msra.mxu0 %v217
        %261 = vmatprep.subr.mxu0 %v220
        %262 = vmatpush1.msra.mxu0 %v219
        %263 = vmatprep.subr.mxu0 %v222
        %264 = vmatpush1.msra.mxu0 %v221
        %265 = vmatprep.subr.mxu0 %v224
        %266 = vmatpush1.msra.mxu0 %v223
        %267 = vmatprep.subr.mxu0 %v226
        %268 = vmatpush1.msra.mxu0 %v225
        %269 = vmatprep.subr.mxu0 %v228
        %270 = vmatpush1.msra.mxu0 %v227
        %271 = vmatprep.subr.mxu0 %v230
        %272 = vmatpush1.msra.mxu0 %v229
        %273 = vmatprep.subr.mxu0 %v232
        %274 = vmatpush1.msra.mxu0 %v231
        %275 = vmatprep.subr.mxu0 %v234
        %276 = vmatpush1.msra.mxu0 %v233
        %277 = vmatprep.subr.mxu0 %v236
        %278 = vmatpush1.msra.mxu0 %v235
        %279 = vmatprep.subr.mxu0 %v238
        %280 = vmatpush1.msra.mxu0 %v237
        %281 = vmatprep.subr.mxu0 %v240
        %282 = vmatpush1.msra.mxu0 %v239
        %283 = vmatprep.subr.mxu0 %v242
        %284 = vmatpush1.msra.mxu0 %v241
        %285 = vmatprep.subr.mxu0 0.0
        %286 = vmatpush1.msra.mxu0 0.0
        %287 = vmatprep.subr.mxu0 0.0
        %288 = vmatpush1.msra.mxu0 0.0
        %289 = vmatprep.subr.mxu0 0.0
        %290 = vmatpush1.msra.mxu0 0.0
        %291 = vmatprep.subr.mxu0 0.0
        %292 = vmatpush1.msra.mxu0 0.0
        %293 = vmatprep.subr.mxu0 0.0
        %294 = vmatpush1.msra.mxu0 0.0
        %295 = vmatprep.subr.mxu0 0.0
        %296 = vmatpush1.msra.mxu0 0.0
        %297 = vmatprep.subr.mxu0 0.0
        %298 = vmatpush1.msra.mxu0 0.0
        %299 = vmatprep.subr.mxu0 0.0
        %300 = vmatpush1.msra.mxu0 0.0
        %301 = vmatprep.subr.mxu0 0.0
        %302 = vmatpush1.msra.mxu0 0.0
        %303 = vmatprep.subr.mxu0 0.0
        %304 = vmatpush1.msra.mxu0 0.0
        %305 = vmatprep.subr.mxu0 0.0
        %306 = vmatpush1.msra.mxu0 0.0
        %307 = vmatprep.subr.mxu0 0.0
        %308 = vmatpush1.msra.mxu0 0.0
        %309 = vmatprep.subr.mxu0 0.0
        %310 = vmatpush1.msra.mxu0 0.0
        %311 = vmatprep.subr.mxu0 0.0
        %312 = vmatpush1.msra.mxu0 0.0
        %313 = vmatprep.subr.mxu0 0.0
        %314 = vmatpush1.msra.mxu0 0.0
        %315 = vmatprep.subr.mxu0 0.0
        %316 = vmatpush1.msra.mxu0 0.0
        %317 = vmatprep.mubr.f32.mxu0 0.0
        %318 = vmatmul.mubr.f32.gmra.mrb[0].mxu0 %v252
        %v319 = vpop.f32.mrb[0].mxu0
        %v320 = vadd.f32 0.0, %v319
        %v321 = vpop.f32.mrb[0].mxu0
        %v322 = vadd.f32 0.0, %v321
        %323 = vdwg.mxu0
        %v325 = vlaneseq
        %v326 = vshrl.u32 %v325, 7
        %v327 = vsub.s32 0, %v326
        %v328 = vrot.slane %v243, %v327
        %v330 = vadd.f32 %v322, %v328
        %331 = vst [vmem:[%s203] sm:$0xff] %v330
        %s332 = scalar_lea.vmem %s177, 8 [#allocation3]
        %v333 = vld [vmem:[%s332] sm:$0xff]
        %v334 = vadd.f32 %v320, %v333
        %v335 = vxor.u32 %v334, 2147483648
        %v336 = vmul.f32 %v335, 1.442695
        %v337 = vpow.pop %v336
        %v338 = vadd.f32 %v337, 1.0
        %v339 = vrcp.pop %v338
        %v340 = vmul.f32 1.0, %v339
        %341 = vmatprep.subr.mxu0 %v212
        %342 = vmatpush1.msra.mxu0 %v211
        %343 = vmatprep.subr.mxu0 %v214
        %344 = vmatpush1.msra.mxu0 %v213
        %345 = vmatprep.subr.mxu0 %v216
        %346 = vmatpush1.msra.mxu0 %v215
        %347 = vmatprep.subr.mxu0 %v218
        %348 = vmatpush1.msra.mxu0 %v217
        %349 = vmatprep.subr.mxu0 %v220
        %350 = vmatpush1.msra.mxu0 %v219
        %351 = vmatprep.subr.mxu0 %v222
        %352 = vmatpush1.msra.mxu0 %v221
        %353 = vmatprep.subr.mxu0 %v224
        %354 = vmatpush1.msra.mxu0 %v223
        %355 = vmatprep.subr.mxu0 %v226
        %356 = vmatpush1.msra.mxu0 %v225
        %357 = vmatprep.subr.mxu0 %v228
        %358 = vmatpush1.msra.mxu0 %v227
        %359 = vmatprep.subr.mxu0 %v230
        %360 = vmatpush1.msra.mxu0 %v229
        %361 = vmatprep.subr.mxu0 %v232
        %362 = vmatpush1.msra.mxu0 %v231
        %363 = vmatprep.subr.mxu0 %v234
        %364 = vmatpush1.msra.mxu0 %v233
        %365 = vmatprep.subr.mxu0 %v236
        %366 = vmatpush1.msra.mxu0 %v235
        %367 = vmatprep.subr.mxu0 %v238
        %368 = vmatpush1.msra.mxu0 %v237
        %369 = vmatprep.subr.mxu0 %v240
        %370 = vmatpush1.msra.mxu0 %v239
        %371 = vmatprep.subr.mxu0 %v242
        %372 = vmatpush1.msra.mxu0 %v241
        %373 = vmatprep.subr.mxu0 0.0
        %374 = vmatpush1.msra.mxu0 0.0
        %375 = vmatprep.subr.mxu0 0.0
        %376 = vmatpush1.msra.mxu0 0.0
        %377 = vmatprep.subr.mxu0 0.0
        %378 = vmatpush1.msra.mxu0 0.0
        %379 = vmatprep.subr.mxu0 0.0
        %380 = vmatpush1.msra.mxu0 0.0
        %381 = vmatprep.subr.mxu0 0.0
        %382 = vmatpush1.msra.mxu0 0.0
        %383 = vmatprep.subr.mxu0 0.0
        %384 = vmatpush1.msra.mxu0 0.0
        %385 = vmatprep.subr.mxu0 0.0
        %386 = vmatpush1.msra.mxu0 0.0
        %387 = vmatprep.subr.mxu0 0.0
        %388 = vmatpush1.msra.mxu0 0.0
        %389 = vmatprep.subr.mxu0 0.0
        %390 = vmatpush1.msra.mxu0 0.0
        %391 = vmatprep.subr.mxu0 0.0
        %392 = vmatpush1.msra.mxu0 0.0
        %393 = vmatprep.subr.mxu0 0.0
        %394 = vmatpush1.msra.mxu0 0.0
        %395 = vmatprep.subr.mxu0 0.0
        %396 = vmatpush1.msra.mxu0 0.0
        %397 = vmatprep.subr.mxu0 0.0
        %398 = vmatpush1.msra.mxu0 0.0
        %399 = vmatprep.subr.mxu0 0.0
        %400 = vmatpush1.msra.mxu0 0.0
        %401 = vmatprep.subr.mxu0 0.0
        %402 = vmatpush1.msra.mxu0 0.0
        %403 = vmatprep.subr.mxu0 0.0
        %404 = vmatpush1.msra.mxu0 0.0
        %405 = vmatprep.mubr.f32.mxu0 0.0
        %406 = vmatmul.mubr.f32.gmra.mrb[0].mxu0 %v340
        %v407 = vpop.f32.mrb[0].mxu0
        %v408 = vadd.f32 0.0, %v407
        %v409 = vpop.f32.mrb[0].mxu0
        %v410 = vadd.f32 0.0, %v409
        %411 = vdwg.mxu0
        %v412 = vadd.f32 %v410, %v328
        %s413 = scalar_lea.vmem %s203, 8 [#allocation8]
        %414 = vst [vmem:[%s413] sm:$0xff] %v412
        %s415 = scalar_lea.vmem %s177, 16 [#allocation3]
        %v416 = vld [vmem:[%s415] sm:$0xff]
        %v417 = vadd.f32 %v408, %v416
        %v418 = vxor.u32 %v417, 2147483648
        %v419 = vmul.f32 %v418, 1.442695
        %v420 = vpow.pop %v419
        %v421 = vadd.f32 %v420, 1.0
        %v422 = vrcp.pop %v421
        %v423 = vmul.f32 1.0, %v422
        %424 = vmatprep.subr.mxu0 %v212
        %425 = vmatpush1.msra.mxu0 %v211
        %426 = vmatprep.subr.mxu0 %v214
        %427 = vmatpush1.msra.mxu0 %v213
        %428 = vmatprep.subr.mxu0 %v216
        %429 = vmatpush1.msra.mxu0 %v215
        %430 = vmatprep.subr.mxu0 %v218
        %431 = vmatpush1.msra.mxu0 %v217
        %432 = vmatprep.subr.mxu0 %v220
        %433 = vmatpush1.msra.mxu0 %v219
        %434 = vmatprep.subr.mxu0 %v222
        %435 = vmatpush1.msra.mxu0 %v221
        %436 = vmatprep.subr.mxu0 %v224
        %437 = vmatpush1.msra.mxu0 %v223
        %438 = vmatprep.subr.mxu0 %v226
        %439 = vmatpush1.msra.mxu0 %v225
        %440 = vmatprep.subr.mxu0 %v228
        %441 = vmatpush1.msra.mxu0 %v227
        %442 = vmatprep.subr.mxu0 %v230
        %443 = vmatpush1.msra.mxu0 %v229
        %444 = vmatprep.subr.mxu0 %v232
        %445 = vmatpush1.msra.mxu0 %v231
        %446 = vmatprep.subr.mxu0 %v234
        %447 = vmatpush1.msra.mxu0 %v233
        %448 = vmatprep.subr.mxu0 %v236
        %449 = vmatpush1.msra.mxu0 %v235
        %450 = vmatprep.subr.mxu0 %v238
        %451 = vmatpush1.msra.mxu0 %v237
        %452 = vmatprep.subr.mxu0 %v240
        %453 = vmatpush1.msra.mxu0 %v239
        %454 = vmatprep.subr.mxu0 %v242
        %455 = vmatpush1.msra.mxu0 %v241
        %456 = vmatprep.subr.mxu0 0.0
        %457 = vmatpush1.msra.mxu0 0.0
        %458 = vmatprep.subr.mxu0 0.0
        %459 = vmatpush1.msra.mxu0 0.0
        %460 = vmatprep.subr.mxu0 0.0
        %461 = vmatpush1.msra.mxu0 0.0
        %462 = vmatprep.subr.mxu0 0.0
        %463 = vmatpush1.msra.mxu0 0.0
        %464 = vmatprep.subr.mxu0 0.0
        %465 = vmatpush1.msra.mxu0 0.0
        %466 = vmatprep.subr.mxu0 0.0
        %467 = vmatpush1.msra.mxu0 0.0
        %468 = vmatprep.subr.mxu0 0.0
        %469 = vmatpush1.msra.mxu0 0.0
        %470 = vmatprep.subr.mxu0 0.0
        %471 = vmatpush1.msra.mxu0 0.0
        %472 = vmatprep.subr.mxu0 0.0
        %473 = vmatpush1.msra.mxu0 0.0
        %474 = vmatprep.subr.mxu0 0.0
        %475 = vmatpush1.msra.mxu0 0.0
        %476 = vmatprep.subr.mxu0 0.0
        %477 = vmatpush1.msra.mxu0 0.0
        %478 = vmatprep.subr.mxu0 0.0
        %479 = vmatpush1.msra.mxu0 0.0
        %480 = vmatprep.subr.mxu0 0.0
        %481 = vmatpush1.msra.mxu0 0.0
        %482 = vmatprep.subr.mxu0 0.0
        %483 = vmatpush1.msra.mxu0 0.0
        %484 = vmatprep.subr.mxu0 0.0
        %485 = vmatpush1.msra.mxu0 0.0
        %486 = vmatprep.subr.mxu0 0.0
        %487 = vmatpush1.msra.mxu0 0.0
        %488 = vmatprep.mubr.f32.mxu0 0.0
        %489 = vmatmul.mubr.f32.gmra.mrb[0].mxu0 %v423
        %v490 = vpop.f32.mrb[0].mxu0
        %v491 = vadd.f32 0.0, %v490
        %v492 = vpop.f32.mrb[0].mxu0
        %v493 = vadd.f32 0.0, %v492
        %494 = vdwg.mxu0
        %v495 = vadd.f32 %v493, %v328
        %s496 = scalar_lea.vmem %s203, 16 [#allocation8]
        %497 = vst [vmem:[%s496] sm:$0xff] %v495
        %s498 = scalar_lea.vmem %s177, 24 [#allocation3]
        %v499 = vld [vmem:[%s498] sm:$0xff]
        %v500 = vadd.f32 %v491, %v499
        %v501 = vxor.u32 %v500, 2147483648
        %v502 = vmul.f32 %v501, 1.442695
        %v503 = vpow.pop %v502
        %v504 = vadd.f32 %v503, 1.0
        %v505 = vrcp.pop %v504
        %v506 = vmul.f32 1.0, %v505
        %507 = vmatprep.subr.mxu0 %v212
        %508 = vmatpush1.msra.mxu0 %v211
        %509 = vmatprep.subr.mxu0 %v214
        %510 = vmatpush1.msra.mxu0 %v213
        %511 = vmatprep.subr.mxu0 %v216
        %512 = vmatpush1.msra.mxu0 %v215
        %513 = vmatprep.subr.mxu0 %v218
        %514 = vmatpush1.msra.mxu0 %v217
        %515 = vmatprep.subr.mxu0 %v220
        %516 = vmatpush1.msra.mxu0 %v219
        %517 = vmatprep.subr.mxu0 %v222
        %518 = vmatpush1.msra.mxu0 %v221
        %519 = vmatprep.subr.mxu0 %v224
        %520 = vmatpush1.msra.mxu0 %v223
        %521 = vmatprep.subr.mxu0 %v226
        %522 = vmatpush1.msra.mxu0 %v225
        %523 = vmatprep.subr.mxu0 %v228
        %524 = vmatpush1.msra.mxu0 %v227
        %525 = vmatprep.subr.mxu0 %v230
        %526 = vmatpush1.msra.mxu0 %v229
        %527 = vmatprep.subr.mxu0 %v232
        %528 = vmatpush1.msra.mxu0 %v231
        %529 = vmatprep.subr.mxu0 %v234
        %530 = vmatpush1.msra.mxu0 %v233
        %531 = vmatprep.subr.mxu0 %v236
        %532 = vmatpush1.msra.mxu0 %v235
        %533 = vmatprep.subr.mxu0 %v238
        %534 = vmatpush1.msra.mxu0 %v237
        %535 = vmatprep.subr.mxu0 %v240
        %536 = vmatpush1.msra.mxu0 %v239
        %537 = vmatprep.subr.mxu0 %v242
        %538 = vmatpush1.msra.mxu0 %v241
        %539 = vmatprep.subr.mxu0 0.0
        %540 = vmatpush1.msra.mxu0 0.0
        %541 = vmatprep.subr.mxu0 0.0
        %542 = vmatpush1.msra.mxu0 0.0
        %543 = vmatprep.subr.mxu0 0.0
        %544 = vmatpush1.msra.mxu0 0.0
        %545 = vmatprep.subr.mxu0 0.0
        %546 = vmatpush1.msra.mxu0 0.0
        %547 = vmatprep.subr.mxu0 0.0
        %548 = vmatpush1.msra.mxu0 0.0
        %549 = vmatprep.subr.mxu0 0.0
        %550 = vmatpush1.msra.mxu0 0.0
        %551 = vmatprep.subr.mxu0 0.0
        %552 = vmatpush1.msra.mxu0 0.0
        %553 = vmatprep.subr.mxu0 0.0
        %554 = vmatpush1.msra.mxu0 0.0
        %555 = vmatprep.subr.mxu0 0.0
        %556 = vmatpush1.msra.mxu0 0.0
        %557 = vmatprep.subr.mxu0 0.0
        %558 = vmatpush1.msra.mxu0 0.0
        %559 = vmatprep.subr.mxu0 0.0
        %560 = vmatpush1.msra.mxu0 0.0
        %561 = vmatprep.subr.mxu0 0.0
        %562 = vmatpush1.msra.mxu0 0.0
        %563 = vmatprep.subr.mxu0 0.0
        %564 = vmatpush1.msra.mxu0 0.0
        %565 = vmatprep.subr.mxu0 0.0
        %566 = vmatpush1.msra.mxu0 0.0
        %567 = vmatprep.subr.mxu0 0.0
        %568 = vmatpush1.msra.mxu0 0.0
        %569 = vmatprep.subr.mxu0 0.0
        %570 = vmatpush1.msra.mxu0 0.0
        %571 = vmatprep.mubr.f32.mxu0 0.0
        %572 = vmatmul.mubr.f32.gmra.mrb[0].mxu0 %v506
        %v573 = vpop.f32.mrb[0].mxu0
        %v574 = vadd.f32 0.0, %v573
        %v575 = vpop.f32.mrb[0].mxu0
        %v576 = vadd.f32 0.0, %v575
        %577 = vdwg.mxu0
        %v578 = vadd.f32 %v576, %v328
        %s579 = scalar_lea.vmem %s203, 24 [#allocation8]
        %580 = vst [vmem:[%s579] sm:$0xff] %v578
        %s581 = scalar_lea.vmem %s177, 32 [#allocation3]
        %v582 = vld [vmem:[%s581] sm:$0xff]
        %v583 = vadd.f32 %v574, %v582
        %v584 = vxor.u32 %v583, 2147483648
        %v585 = vmul.f32 %v584, 1.442695
        %v586 = vpow.pop %v585
        %v587 = vadd.f32 %v586, 1.0
        %v588 = vrcp.pop %v587
        %v589 = vmul.f32 1.0, %v588
        %590 = vmatprep.subr.mxu0 %v212
        %591 = vmatpush1.msra.mxu0 %v211
        %592 = vmatprep.subr.mxu0 %v214
        %593 = vmatpush1.msra.mxu0 %v213
        %594 = vmatprep.subr.mxu0 %v216
        %595 = vmatpush1.msra.mxu0 %v215
        %596 = vmatprep.subr.mxu0 %v218
        %597 = vmatpush1.msra.mxu0 %v217
        %598 = vmatprep.subr.mxu0 %v220
        %599 = vmatpush1.msra.mxu0 %v219
        %600 = vmatprep.subr.mxu0 %v222
        %601 = vmatpush1.msra.mxu0 %v221
        %602 = vmatprep.subr.mxu0 %v224
        %603 = vmatpush1.msra.mxu0 %v223
        %604 = vmatprep.subr.mxu0 %v226
        %605 = vmatpush1.msra.mxu0 %v225
        %606 = vmatprep.subr.mxu0 %v228
        %607 = vmatpush1.msra.mxu0 %v227
        %608 = vmatprep.subr.mxu0 %v230
        %609 = vmatpush1.msra.mxu0 %v229
        %610 = vmatprep.subr.mxu0 %v232
        %611 = vmatpush1.msra.mxu0 %v231
        %612 = vmatprep.subr.mxu0 %v234
        %613 = vmatpush1.msra.mxu0 %v233
        %614 = vmatprep.subr.mxu0 %v236
        %615 = vmatpush1.msra.mxu0 %v235
        %616 = vmatprep.subr.mxu0 %v238
        %617 = vmatpush1.msra.mxu0 %v237
        %618 = vmatprep.subr.mxu0 %v240
        %619 = vmatpush1.msra.mxu0 %v239
        %620 = vmatprep.subr.mxu0 %v242
        %621 = vmatpush1.msra.mxu0 %v241
        %622 = vmatprep.subr.mxu0 0.0
        %623 = vmatpush1.msra.mxu0 0.0
        %624 = vmatprep.subr.mxu0 0.0
        %625 = vmatpush1.msra.mxu0 0.0
        %626 = vmatprep.subr.mxu0 0.0
        %627 = vmatpush1.msra.mxu0 0.0
        %628 = vmatprep.subr.mxu0 0.0
        %629 = vmatpush1.msra.mxu0 0.0
        %630 = vmatprep.subr.mxu0 0.0
        %631 = vmatpush1.msra.mxu0 0.0
        %632 = vmatprep.subr.mxu0 0.0
        %633 = vmatpush1.msra.mxu0 0.0
        %634 = vmatprep.subr.mxu0 0.0
        %635 = vmatpush1.msra.mxu0 0.0
        %636 = vmatprep.subr.mxu0 0.0
        %637 = vmatpush1.msra.mxu0 0.0
        %638 = vmatprep.subr.mxu0 0.0
        %639 = vmatpush1.msra.mxu0 0.0
        %640 = vmatprep.subr.mxu0 0.0
        %641 = vmatpush1.msra.mxu0 0.0
        %642 = vmatprep.subr.mxu0 0.0
        %643 = vmatpush1.msra.mxu0 0.0
        %644 = vmatprep.subr.mxu0 0.0
        %645 = vmatpush1.msra.mxu0 0.0
        %646 = vmatprep.subr.mxu0 0.0
        %647 = vmatpush1.msra.mxu0 0.0
        %648 = vmatprep.subr.mxu0 0.0
        %649 = vmatpush1.msra.mxu0 0.0
        %650 = vmatprep.subr.mxu0 0.0
        %651 = vmatpush1.msra.mxu0 0.0
        %652 = vmatprep.subr.mxu0 0.0
        %653 = vmatpush1.msra.mxu0 0.0
        %654 = vmatprep.mubr.f32.mxu0 0.0
        %655 = vmatmul.mubr.f32.gmra.mrb[0].mxu0 %v589
        %v656 = vpop.f32.mrb[0].mxu0
        %v657 = vadd.f32 0.0, %v656
        %v658 = vpop.f32.mrb[0].mxu0
        %v659 = vadd.f32 0.0, %v658
        %660 = vdwg.mxu0
        %v661 = vadd.f32 %v659, %v328
        %s662 = scalar_lea.vmem %s203, 32 [#allocation8]
        %663 = vst [vmem:[%s662] sm:$0xff] %v661
        %s664 = scalar_lea.vmem %s177, 40 [#allocation3]
        %v665 = vld [vmem:[%s664] sm:$0xff]
        %v666 = vadd.f32 %v657, %v665
        %v667 = vxor.u32 %v666, 2147483648
        %v668 = vmul.f32 %v667, 1.442695
        %v669 = vpow.pop %v668
        %v670 = vadd.f32 %v669, 1.0
        %v671 = vrcp.pop %v670
        %v672 = vmul.f32 1.0, %v671
        %673 = vmatprep.subr.mxu0 %v212
        %674 = vmatpush1.msra.mxu0 %v211
        %675 = vmatprep.subr.mxu0 %v214
        %676 = vmatpush1.msra.mxu0 %v213
        %677 = vmatprep.subr.mxu0 %v216
        %678 = vmatpush1.msra.mxu0 %v215
        %679 = vmatprep.subr.mxu0 %v218
        %680 = vmatpush1.msra.mxu0 %v217
        %681 = vmatprep.subr.mxu0 %v220
        %682 = vmatpush1.msra.mxu0 %v219
        %683 = vmatprep.subr.mxu0 %v222
        %684 = vmatpush1.msra.mxu0 %v221
        %685 = vmatprep.subr.mxu0 %v224
        %686 = vmatpush1.msra.mxu0 %v223
        %687 = vmatprep.subr.mxu0 %v226
        %688 = vmatpush1.msra.mxu0 %v225
        %689 = vmatprep.subr.mxu0 %v228
        %690 = vmatpush1.msra.mxu0 %v227
        %691 = vmatprep.subr.mxu0 %v230
        %692 = vmatpush1.msra.mxu0 %v229
        %693 = vmatprep.subr.mxu0 %v232
        %694 = vmatpush1.msra.mxu0 %v231
        %695 = vmatprep.subr.mxu0 %v234
        %696 = vmatpush1.msra.mxu0 %v233
        %697 = vmatprep.subr.mxu0 %v236
        %698 = vmatpush1.msra.mxu0 %v235
        %699 = vmatprep.subr.mxu0 %v238
        %700 = vmatpush1.msra.mxu0 %v237
        %701 = vmatprep.subr.mxu0 %v240
        %702 = vmatpush1.msra.mxu0 %v239
        %703 = vmatprep.subr.mxu0 %v242
        %704 = vmatpush1.msra.mxu0 %v241
        %705 = vmatprep.subr.mxu0 0.0
        %706 = vmatpush1.msra.mxu0 0.0
        %707 = vmatprep.subr.mxu0 0.0
        %708 = vmatpush1.msra.mxu0 0.0
        %709 = vmatprep.subr.mxu0 0.0
        %710 = vmatpush1.msra.mxu0 0.0
        %711 = vmatprep.subr.mxu0 0.0
        %712 = vmatpush1.msra.mxu0 0.0
        %713 = vmatprep.subr.mxu0 0.0
        %714 = vmatpush1.msra.mxu0 0.0
        %715 = vmatprep.subr.mxu0 0.0
        %716 = vmatpush1.msra.mxu0 0.0
        %717 = vmatprep.subr.mxu0 0.0
        %718 = vmatpush1.msra.mxu0 0.0
        %719 = vmatprep.subr.mxu0 0.0
        %720 = vmatpush1.msra.mxu0 0.0
        %721 = vmatprep.subr.mxu0 0.0
        %722 = vmatpush1.msra.mxu0 0.0
        %723 = vmatprep.subr.mxu0 0.0
        %724 = vmatpush1.msra.mxu0 0.0
        %725 = vmatprep.subr.mxu0 0.0
        %726 = vmatpush1.msra.mxu0 0.0
        %727 = vmatprep.subr.mxu0 0.0
        %728 = vmatpush1.msra.mxu0 0.0
        %729 = vmatprep.subr.mxu0 0.0
        %730 = vmatpush1.msra.mxu0 0.0
        %731 = vmatprep.subr.mxu0 0.0
        %732 = vmatpush1.msra.mxu0 0.0
        %733 = vmatprep.subr.mxu0 0.0
        %734 = vmatpush1.msra.mxu0 0.0
        %735 = vmatprep.subr.mxu0 0.0
        %736 = vmatpush1.msra.mxu0 0.0
        %737 = vmatprep.mubr.f32.mxu0 0.0
        %738 = vmatmul.mubr.f32.gmra.mrb[0].mxu0 %v672
        %v739 = vpop.f32.mrb[0].mxu0
        %v740 = vadd.f32 0.0, %v739
        %v741 = vpop.f32.mrb[0].mxu0
        %v742 = vadd.f32 0.0, %v741
        %743 = vdwg.mxu0
        %v744 = vadd.f32 %v742, %v328
        %s745 = scalar_lea.vmem %s203, 40 [#allocation8]
        %746 = vst [vmem:[%s745] sm:$0xff] %v744
        %s747 = scalar_lea.vmem %s177, 48 [#allocation3]
        %v748 = vld [vmem:[%s747] sm:$0xff]
        %v749 = vadd.f32 %v740, %v748
        %v750 = vxor.u32 %v749, 2147483648
        %v751 = vmul.f32 %v750, 1.442695
        %v752 = vpow.pop %v751
        %v753 = vadd.f32 %v752, 1.0
        %v754 = vrcp.pop %v753
        %v755 = vmul.f32 1.0, %v754
        %756 = vmatprep.subr.mxu0 %v212
        %757 = vmatpush1.msra.mxu0 %v211
        %758 = vmatprep.subr.mxu0 %v214
        %759 = vmatpush1.msra.mxu0 %v213
        %760 = vmatprep.subr.mxu0 %v216
        %761 = vmatpush1.msra.mxu0 %v215
        %762 = vmatprep.subr.mxu0 %v218
        %763 = vmatpush1.msra.mxu0 %v217
        %764 = vmatprep.subr.mxu0 %v220
        %765 = vmatpush1.msra.mxu0 %v219
        %766 = vmatprep.subr.mxu0 %v222
        %767 = vmatpush1.msra.mxu0 %v221
        %768 = vmatprep.subr.mxu0 %v224
        %769 = vmatpush1.msra.mxu0 %v223
        %770 = vmatprep.subr.mxu0 %v226
        %771 = vmatpush1.msra.mxu0 %v225
        %772 = vmatprep.subr.mxu0 %v228
        %773 = vmatpush1.msra.mxu0 %v227
        %774 = vmatprep.subr.mxu0 %v230
        %775 = vmatpush1.msra.mxu0 %v229
        %776 = vmatprep.subr.mxu0 %v232
        %777 = vmatpush1.msra.mxu0 %v231
        %778 = vmatprep.subr.mxu0 %v234
        %779 = vmatpush1.msra.mxu0 %v233
        %780 = vmatprep.subr.mxu0 %v236
        %781 = vmatpush1.msra.mxu0 %v235
        %782 = vmatprep.subr.mxu0 %v238
        %783 = vmatpush1.msra.mxu0 %v237
        %784 = vmatprep.subr.mxu0 %v240
        %785 = vmatpush1.msra.mxu0 %v239
        %786 = vmatprep.subr.mxu0 %v242
        %787 = vmatpush1.msra.mxu0 %v241
        %788 = vmatprep.subr.mxu0 0.0
        %789 = vmatpush1.msra.mxu0 0.0
        %790 = vmatprep.subr.mxu0 0.0
        %791 = vmatpush1.msra.mxu0 0.0
        %792 = vmatprep.subr.mxu0 0.0
        %793 = vmatpush1.msra.mxu0 0.0
        %794 = vmatprep.subr.mxu0 0.0
        %795 = vmatpush1.msra.mxu0 0.0
        %796 = vmatprep.subr.mxu0 0.0
        %797 = vmatpush1.msra.mxu0 0.0
        %798 = vmatprep.subr.mxu0 0.0
        %799 = vmatpush1.msra.mxu0 0.0
        %800 = vmatprep.subr.mxu0 0.0
        %801 = vmatpush1.msra.mxu0 0.0
        %802 = vmatprep.subr.mxu0 0.0
        %803 = vmatpush1.msra.mxu0 0.0
        %804 = vmatprep.subr.mxu0 0.0
        %805 = vmatpush1.msra.mxu0 0.0
        %806 = vmatprep.subr.mxu0 0.0
        %807 = vmatpush1.msra.mxu0 0.0
        %808 = vmatprep.subr.mxu0 0.0
        %809 = vmatpush1.msra.mxu0 0.0
        %810 = vmatprep.subr.mxu0 0.0
        %811 = vmatpush1.msra.mxu0 0.0
        %812 = vmatprep.subr.mxu0 0.0
        %813 = vmatpush1.msra.mxu0 0.0
        %814 = vmatprep.subr.mxu0 0.0
        %815 = vmatpush1.msra.mxu0 0.0
        %816 = vmatprep.subr.mxu0 0.0
        %817 = vmatpush1.msra.mxu0 0.0
        %818 = vmatprep.subr.mxu0 0.0
        %819 = vmatpush1.msra.mxu0 0.0
        %820 = vmatprep.mubr.f32.mxu0 0.0
        %821 = vmatmul.mubr.f32.gmra.mrb[0].mxu0 %v755
        %v822 = vpop.f32.mrb[0].mxu0
        %v823 = vadd.f32 0.0, %v822
        %v824 = vpop.f32.mrb[0].mxu0
        %v825 = vadd.f32 0.0, %v824
        %826 = vdwg.mxu0
        %v827 = vadd.f32 %v825, %v328
        %s828 = scalar_lea.vmem %s203, 48 [#allocation8]
        %829 = vst [vmem:[%s828] sm:$0xff] %v827
        %s830 = scalar_lea.vmem %s177, 56 [#allocation3]
        %v831 = vld [vmem:[%s830] sm:$0xff]
        %v832 = vadd.f32 %v823, %v831
        %v833 = vxor.u32 %v832, 2147483648
        %v834 = vmul.f32 %v833, 1.442695
        %v835 = vpow.pop %v834
        %v836 = vadd.f32 %v835, 1.0
        %v837 = vrcp.pop %v836
        %v838 = vmul.f32 1.0, %v837
        %839 = vmatprep.subr.mxu0 %v212
        %840 = vmatpush1.msra.mxu0 %v211
        %841 = vmatprep.subr.mxu0 %v214
        %842 = vmatpush1.msra.mxu0 %v213
        %843 = vmatprep.subr.mxu0 %v216
        %844 = vmatpush1.msra.mxu0 %v215
        %845 = vmatprep.subr.mxu0 %v218
        %846 = vmatpush1.msra.mxu0 %v217
        %847 = vmatprep.subr.mxu0 %v220
        %848 = vmatpush1.msra.mxu0 %v219
        %849 = vmatprep.subr.mxu0 %v222
        %850 = vmatpush1.msra.mxu0 %v221
        %851 = vmatprep.subr.mxu0 %v224
        %852 = vmatpush1.msra.mxu0 %v223
        %853 = vmatprep.subr.mxu0 %v226
        %854 = vmatpush1.msra.mxu0 %v225
        %855 = vmatprep.subr.mxu0 %v228
        %856 = vmatpush1.msra.mxu0 %v227
        %857 = vmatprep.subr.mxu0 %v230
        %858 = vmatpush1.msra.mxu0 %v229
        %859 = vmatprep.subr.mxu0 %v232
        %860 = vmatpush1.msra.mxu0 %v231
        %861 = vmatprep.subr.mxu0 %v234
        %862 = vmatpush1.msra.mxu0 %v233
        %863 = vmatprep.subr.mxu0 %v236
        %864 = vmatpush1.msra.mxu0 %v235
        %865 = vmatprep.subr.mxu0 %v238
        %866 = vmatpush1.msra.mxu0 %v237
        %867 = vmatprep.subr.mxu0 %v240
        %868 = vmatpush1.msra.mxu0 %v239
        %869 = vmatprep.subr.mxu0 %v242
        %870 = vmatpush1.msra.mxu0 %v241
        %871 = vmatprep.subr.mxu0 0.0
        %872 = vmatpush1.msra.mxu0 0.0
        %873 = vmatprep.subr.mxu0 0.0
        %874 = vmatpush1.msra.mxu0 0.0
        %875 = vmatprep.subr.mxu0 0.0
        %876 = vmatpush1.msra.mxu0 0.0
        %877 = vmatprep.subr.mxu0 0.0
        %878 = vmatpush1.msra.mxu0 0.0
        %879 = vmatprep.subr.mxu0 0.0
        %880 = vmatpush1.msra.mxu0 0.0
        %881 = vmatprep.subr.mxu0 0.0
        %882 = vmatpush1.msra.mxu0 0.0
        %883 = vmatprep.subr.mxu0 0.0
        %884 = vmatpush1.msra.mxu0 0.0
        %885 = vmatprep.subr.mxu0 0.0
        %886 = vmatpush1.msra.mxu0 0.0
        %887 = vmatprep.subr.mxu0 0.0
        %888 = vmatpush1.msra.mxu0 0.0
        %889 = vmatprep.subr.mxu0 0.0
        %890 = vmatpush1.msra.mxu0 0.0
        %891 = vmatprep.subr.mxu0 0.0
        %892 = vmatpush1.msra.mxu0 0.0
        %893 = vmatprep.subr.mxu0 0.0
        %894 = vmatpush1.msra.mxu0 0.0
        %895 = vmatprep.subr.mxu0 0.0
        %896 = vmatpush1.msra.mxu0 0.0
        %897 = vmatprep.subr.mxu0 0.0
        %898 = vmatpush1.msra.mxu0 0.0
        %899 = vmatprep.subr.mxu0 0.0
        %900 = vmatpush1.msra.mxu0 0.0
        %901 = vmatprep.subr.mxu0 0.0
        %902 = vmatpush1.msra.mxu0 0.0
        %903 = vmatprep.mubr.f32.mxu0 0.0
        %904 = vmatmul.mubr.f32.gmra.mrb[0].mxu0 %v838
        %v905 = vpop.f32.mrb[0].mxu0
        %v906 = vadd.f32 0.0, %v905
        %v907 = vpop.f32.mrb[0].mxu0
        %v908 = vadd.f32 0.0, %v907
        %909 = vdwg.mxu0
        %v910 = vadd.f32 %v908, %v328
        %s911 = scalar_lea.vmem %s203, 56 [#allocation8]
        %912 = vst [vmem:[%s911] sm:$0xff] %v910
        %s913 = scalar_lea.vmem %s177, 64 [#allocation3]
        %v914 = vld [vmem:[%s913] sm:$0xff]
        %v915 = vadd.f32 %v906, %v914
        %v916 = vxor.u32 %v915, 2147483648
        %v917 = vmul.f32 %v916, 1.442695
        %v918 = vpow.pop %v917
        %v919 = vadd.f32 %v918, 1.0
        %v920 = vrcp.pop %v919
        %v921 = vmul.f32 1.0, %v920
        %922 = vmatprep.subr.mxu0 %v212
        %923 = vmatpush1.msra.mxu0 %v211
        %924 = vmatprep.subr.mxu0 %v214
        %925 = vmatpush1.msra.mxu0 %v213
        %926 = vmatprep.subr.mxu0 %v216
        %927 = vmatpush1.msra.mxu0 %v215
        %928 = vmatprep.subr.mxu0 %v218
        %929 = vmatpush1.msra.mxu0 %v217
        %930 = vmatprep.subr.mxu0 %v220
        %931 = vmatpush1.msra.mxu0 %v219
        %932 = vmatprep.subr.mxu0 %v222
        %933 = vmatpush1.msra.mxu0 %v221
        %934 = vmatprep.subr.mxu0 %v224
        %935 = vmatpush1.msra.mxu0 %v223
        %936 = vmatprep.subr.mxu0 %v226
        %937 = vmatpush1.msra.mxu0 %v225
        %938 = vmatprep.subr.mxu0 %v228
        %939 = vmatpush1.msra.mxu0 %v227
        %940 = vmatprep.subr.mxu0 %v230
        %941 = vmatpush1.msra.mxu0 %v229
        %942 = vmatprep.subr.mxu0 %v232
        %943 = vmatpush1.msra.mxu0 %v231
        %944 = vmatprep.subr.mxu0 %v234
        %945 = vmatpush1.msra.mxu0 %v233
        %946 = vmatprep.subr.mxu0 %v236
        %947 = vmatpush1.msra.mxu0 %v235
        %948 = vmatprep.subr.mxu0 %v238
        %949 = vmatpush1.msra.mxu0 %v237
        %950 = vmatprep.subr.mxu0 %v240
        %951 = vmatpush1.msra.mxu0 %v239
        %952 = vmatprep.subr.mxu0 %v242
        %953 = vmatpush1.msra.mxu0 %v241
        %954 = vmatprep.subr.mxu0 0.0
        %955 = vmatpush1.msra.mxu0 0.0
        %956 = vmatprep.subr.mxu0 0.0
        %957 = vmatpush1.msra.mxu0 0.0
        %958 = vmatprep.subr.mxu0 0.0
        %959 = vmatpush1.msra.mxu0 0.0
        %960 = vmatprep.subr.mxu0 0.0
        %961 = vmatpush1.msra.mxu0 0.0
        %962 = vmatprep.subr.mxu0 0.0
        %963 = vmatpush1.msra.mxu0 0.0
        %964 = vmatprep.subr.mxu0 0.0
        %965 = vmatpush1.msra.mxu0 0.0
        %966 = vmatprep.subr.mxu0 0.0
        %967 = vmatpush1.msra.mxu0 0.0
        %968 = vmatprep.subr.mxu0 0.0
        %969 = vmatpush1.msra.mxu0 0.0
        %970 = vmatprep.subr.mxu0 0.0
        %971 = vmatpush1.msra.mxu0 0.0
        %972 = vmatprep.subr.mxu0 0.0
        %973 = vmatpush1.msra.mxu0 0.0
        %974 = vmatprep.subr.mxu0 0.0
        %975 = vmatpush1.msra.mxu0 0.0
        %976 = vmatprep.subr.mxu0 0.0
        %977 = vmatpush1.msra.mxu0 0.0
        %978 = vmatprep.subr.mxu0 0.0
        %979 = vmatpush1.msra.mxu0 0.0
        %980 = vmatprep.subr.mxu0 0.0
        %981 = vmatpush1.msra.mxu0 0.0
        %982 = vmatprep.subr.mxu0 0.0
        %983 = vmatpush1.msra.mxu0 0.0
        %984 = vmatprep.subr.mxu0 0.0
        %985 = vmatpush1.msra.mxu0 0.0
        %986 = vmatprep.mubr.f32.mxu0 0.0
        %987 = vmatmul.mubr.f32.gmra.mrb[0].mxu0 %v921
        %v988 = vpop.f32.mrb[0].mxu0
        %v989 = vadd.f32 0.0, %v988
        %v990 = vpop.f32.mrb[0].mxu0
        %v991 = vadd.f32 0.0, %v990
        %992 = vdwg.mxu0
        %v993 = vadd.f32 %v991, %v328
        %s994 = scalar_lea.vmem %s203, 64 [#allocation8]
        %995 = vst [vmem:[%s994] sm:$0xff] %v993
        %s996 = scalar_lea.vmem %s177, 72 [#allocation3]
        %v997 = vld [vmem:[%s996] sm:$0xff]
        %v998 = vadd.f32 %v989, %v997
        %v999 = vxor.u32 %v998, 2147483648
        %v1000 = vmul.f32 %v999, 1.442695
        %v1001 = vpow.pop %v1000
        %v1002 = vadd.f32 %v1001, 1.0
        %v1003 = vrcp.pop %v1002
        %v1004 = vmul.f32 1.0, %v1003
        %1005 = vmatprep.subr.mxu0 %v212
        %1006 = vmatpush1.msra.mxu0 %v211
        %1007 = vmatprep.subr.mxu0 %v214
        %1008 = vmatpush1.msra.mxu0 %v213
        %1009 = vmatprep.subr.mxu0 %v216
        %1010 = vmatpush1.msra.mxu0 %v215
        %1011 = vmatprep.subr.mxu0 %v218
        %1012 = vmatpush1.msra.mxu0 %v217
        %1013 = vmatprep.subr.mxu0 %v220
        %1014 = vmatpush1.msra.mxu0 %v219
        %1015 = vmatprep.subr.mxu0 %v222
        %1016 = vmatpush1.msra.mxu0 %v221
        %1017 = vmatprep.subr.mxu0 %v224
        %1018 = vmatpush1.msra.mxu0 %v223
        %1019 = vmatprep.subr.mxu0 %v226
        %1020 = vmatpush1.msra.mxu0 %v225
        %1021 = vmatprep.subr.mxu0 %v228
        %1022 = vmatpush1.msra.mxu0 %v227
        %1023 = vmatprep.subr.mxu0 %v230
        %1024 = vmatpush1.msra.mxu0 %v229
        %1025 = vmatprep.subr.mxu0 %v232
        %1026 = vmatpush1.msra.mxu0 %v231
        %1027 = vmatprep.subr.mxu0 %v234
        %1028 = vmatpush1.msra.mxu0 %v233
        %1029 = vmatprep.subr.mxu0 %v236
        %1030 = vmatpush1.msra.mxu0 %v235
        %1031 = vmatprep.subr.mxu0 %v238
        %1032 = vmatpush1.msra.mxu0 %v237
        %1033 = vmatprep.subr.mxu0 %v240
        %1034 = vmatpush1.msra.mxu0 %v239
        %1035 = vmatprep.subr.mxu0 %v242
        %1036 = vmatpush1.msra.mxu0 %v241
        %1037 = vmatprep.subr.mxu0 0.0
        %1038 = vmatpush1.msra.mxu0 0.0
        %1039 = vmatprep.subr.mxu0 0.0
        %1040 = vmatpush1.msra.mxu0 0.0
        %1041 = vmatprep.subr.mxu0 0.0
        %1042 = vmatpush1.msra.mxu0 0.0
        %1043 = vmatprep.subr.mxu0 0.0
        %1044 = vmatpush1.msra.mxu0 0.0
        %1045 = vmatprep.subr.mxu0 0.0
        %1046 = vmatpush1.msra.mxu0 0.0
        %1047 = vmatprep.subr.mxu0 0.0
        %1048 = vmatpush1.msra.mxu0 0.0
        %1049 = vmatprep.subr.mxu0 0.0
        %1050 = vmatpush1.msra.mxu0 0.0
        %1051 = vmatprep.subr.mxu0 0.0
        %1052 = vmatpush1.msra.mxu0 0.0
        %1053 = vmatprep.subr.mxu0 0.0
        %1054 = vmatpush1.msra.mxu0 0.0
        %1055 = vmatprep.subr.mxu0 0.0
        %1056 = vmatpush1.msra.mxu0 0.0
        %1057 = vmatprep.subr.mxu0 0.0
        %1058 = vmatpush1.msra.mxu0 0.0
        %1059 = vmatprep.subr.mxu0 0.0
        %1060 = vmatpush1.msra.mxu0 0.0
        %1061 = vmatprep.subr.mxu0 0.0
        %1062 = vmatpush1.msra.mxu0 0.0
        %1063 = vmatprep.subr.mxu0 0.0
        %1064 = vmatpush1.msra.mxu0 0.0
        %1065 = vmatprep.subr.mxu0 0.0
        %1066 = vmatpush1.msra.mxu0 0.0
        %1067 = vmatprep.subr.mxu0 0.0
        %1068 = vmatpush1.msra.mxu0 0.0
        %1069 = vmatprep.mubr.f32.mxu0 0.0
        %1070 = vmatmul.mubr.f32.gmra.mrb[0].mxu0 %v1004
        %v1071 = vpop.f32.mrb[0].mxu0
        %v1072 = vadd.f32 0.0, %v1071
        %v1073 = vpop.f32.mrb[0].mxu0
        %v1074 = vadd.f32 0.0, %v1073
        %1075 = vdwg.mxu0
        %v1076 = vadd.f32 %v1074, %v328
        %s1077 = scalar_lea.vmem %s203, 72 [#allocation8]
        %1078 = vst [vmem:[%s1077] sm:$0xff] %v1076
        %s1079 = scalar_lea.vmem %s177, 80 [#allocation3]
        %v1080 = vld [vmem:[%s1079] sm:$0xff]
        %v1081 = vadd.f32 %v1072, %v1080
        %v1082 = vxor.u32 %v1081, 2147483648
        %v1083 = vmul.f32 %v1082, 1.442695
        %v1084 = vpow.pop %v1083
        %v1085 = vadd.f32 %v1084, 1.0
        %v1086 = vrcp.pop %v1085
        %v1087 = vmul.f32 1.0, %v1086
        %1088 = vmatprep.subr.mxu0 %v212
        %1089 = vmatpush1.msra.mxu0 %v211
        %1090 = vmatprep.subr.mxu0 %v214
        %1091 = vmatpush1.msra.mxu0 %v213
        %1092 = vmatprep.subr.mxu0 %v216
        %1093 = vmatpush1.msra.mxu0 %v215
        %1094 = vmatprep.subr.mxu0 %v218
        %1095 = vmatpush1.msra.mxu0 %v217
        %1096 = vmatprep.subr.mxu0 %v220
        %1097 = vmatpush1.msra.mxu0 %v219
        %1098 = vmatprep.subr.mxu0 %v222
        %1099 = vmatpush1.msra.mxu0 %v221
        %1100 = vmatprep.subr.mxu0 %v224
        %1101 = vmatpush1.msra.mxu0 %v223
        %1102 = vmatprep.subr.mxu0 %v226
        %1103 = vmatpush1.msra.mxu0 %v225
        %1104 = vmatprep.subr.mxu0 %v228
        %1105 = vmatpush1.msra.mxu0 %v227
        %1106 = vmatprep.subr.mxu0 %v230
        %1107 = vmatpush1.msra.mxu0 %v229
        %1108 = vmatprep.subr.mxu0 %v232
        %1109 = vmatpush1.msra.mxu0 %v231
        %1110 = vmatprep.subr.mxu0 %v234
        %1111 = vmatpush1.msra.mxu0 %v233
        %1112 = vmatprep.subr.mxu0 %v236
        %1113 = vmatpush1.msra.mxu0 %v235
        %1114 = vmatprep.subr.mxu0 %v238
        %1115 = vmatpush1.msra.mxu0 %v237
        %1116 = vmatprep.subr.mxu0 %v240
        %1117 = vmatpush1.msra.mxu0 %v239
        %1118 = vmatprep.subr.mxu0 %v242
        %1119 = vmatpush1.msra.mxu0 %v241
        %1120 = vmatprep.subr.mxu0 0.0
        %1121 = vmatpush1.msra.mxu0 0.0
        %1122 = vmatprep.subr.mxu0 0.0
        %1123 = vmatpush1.msra.mxu0 0.0
        %1124 = vmatprep.subr.mxu0 0.0
        %1125 = vmatpush1.msra.mxu0 0.0
        %1126 = vmatprep.subr.mxu0 0.0
        %1127 = vmatpush1.msra.mxu0 0.0
        %1128 = vmatprep.subr.mxu0 0.0
        %1129 = vmatpush1.msra.mxu0 0.0
        %1130 = vmatprep.subr.mxu0 0.0
        %1131 = vmatpush1.msra.mxu0 0.0
        %1132 = vmatprep.subr.mxu0 0.0
        %1133 = vmatpush1.msra.mxu0 0.0
        %1134 = vmatprep.subr.mxu0 0.0
        %1135 = vmatpush1.msra.mxu0 0.0
        %1136 = vmatprep.subr.mxu0 0.0
        %1137 = vmatpush1.msra.mxu0 0.0
        %1138 = vmatprep.subr.mxu0 0.0
        %1139 = vmatpush1.msra.mxu0 0.0
        %1140 = vmatprep.subr.mxu0 0.0
        %1141 = vmatpush1.msra.mxu0 0.0
        %1142 = vmatprep.subr.mxu0 0.0
        %1143 = vmatpush1.msra.mxu0 0.0
        %1144 = vmatprep.subr.mxu0 0.0
        %1145 = vmatpush1.msra.mxu0 0.0
        %1146 = vmatprep.subr.mxu0 0.0
        %1147 = vmatpush1.msra.mxu0 0.0
        %1148 = vmatprep.subr.mxu0 0.0
        %1149 = vmatpush1.msra.mxu0 0.0
        %1150 = vmatprep.subr.mxu0 0.0
        %1151 = vmatpush1.msra.mxu0 0.0
        %1152 = vmatprep.mubr.f32.mxu0 0.0
        %1153 = vmatmul.mubr.f32.gmra.mrb[0].mxu0 %v1087
        %v1154 = vpop.f32.mrb[0].mxu0
        %v1155 = vadd.f32 0.0, %v1154
        %v1156 = vpop.f32.mrb[0].mxu0
        %v1157 = vadd.f32 0.0, %v1156
        %1158 = vdwg.mxu0
        %v1159 = vadd.f32 %v1157, %v328
        %s1160 = scalar_lea.vmem %s203, 80 [#allocation8]
        %1161 = vst [vmem:[%s1160] sm:$0xff] %v1159
        %s1162 = scalar_lea.vmem %s177, 88 [#allocation3]
        %v1163 = vld [vmem:[%s1162] sm:$0xff]
        %v1164 = vadd.f32 %v1155, %v1163
        %v1165 = vxor.u32 %v1164, 2147483648
        %v1166 = vmul.f32 %v1165, 1.442695
        %v1167 = vpow.pop %v1166
        %v1168 = vadd.f32 %v1167, 1.0
        %v1169 = vrcp.pop %v1168
        %v1170 = vmul.f32 1.0, %v1169
        %1171 = vmatprep.subr.mxu0 %v212
        %1172 = vmatpush1.msra.mxu0 %v211
        %1173 = vmatprep.subr.mxu0 %v214
        %1174 = vmatpush1.msra.mxu0 %v213
        %1175 = vmatprep.subr.mxu0 %v216
        %1176 = vmatpush1.msra.mxu0 %v215
        %1177 = vmatprep.subr.mxu0 %v218
        %1178 = vmatpush1.msra.mxu0 %v217
        %1179 = vmatprep.subr.mxu0 %v220
        %1180 = vmatpush1.msra.mxu0 %v219
        %1181 = vmatprep.subr.mxu0 %v222
        %1182 = vmatpush1.msra.mxu0 %v221
        %1183 = vmatprep.subr.mxu0 %v224
        %1184 = vmatpush1.msra.mxu0 %v223
        %1185 = vmatprep.subr.mxu0 %v226
        %1186 = vmatpush1.msra.mxu0 %v225
        %1187 = vmatprep.subr.mxu0 %v228
        %1188 = vmatpush1.msra.mxu0 %v227
        %1189 = vmatprep.subr.mxu0 %v230
        %1190 = vmatpush1.msra.mxu0 %v229
        %1191 = vmatprep.subr.mxu0 %v232
        %1192 = vmatpush1.msra.mxu0 %v231
        %1193 = vmatprep.subr.mxu0 %v234
        %1194 = vmatpush1.msra.mxu0 %v233
        %1195 = vmatprep.subr.mxu0 %v236
        %1196 = vmatpush1.msra.mxu0 %v235
        %1197 = vmatprep.subr.mxu0 %v238
        %1198 = vmatpush1.msra.mxu0 %v237
        %1199 = vmatprep.subr.mxu0 %v240
        %1200 = vmatpush1.msra.mxu0 %v239
        %1201 = vmatprep.subr.mxu0 %v242
        %1202 = vmatpush1.msra.mxu0 %v241
        %1203 = vmatprep.subr.mxu0 0.0
        %1204 = vmatpush1.msra.mxu0 0.0
        %1205 = vmatprep.subr.mxu0 0.0
        %1206 = vmatpush1.msra.mxu0 0.0
        %1207 = vmatprep.subr.mxu0 0.0
        %1208 = vmatpush1.msra.mxu0 0.0
        %1209 = vmatprep.subr.mxu0 0.0
        %1210 = vmatpush1.msra.mxu0 0.0
        %1211 = vmatprep.subr.mxu0 0.0
        %1212 = vmatpush1.msra.mxu0 0.0
        %1213 = vmatprep.subr.mxu0 0.0
        %1214 = vmatpush1.msra.mxu0 0.0
        %1215 = vmatprep.subr.mxu0 0.0
        %1216 = vmatpush1.msra.mxu0 0.0
        %1217 = vmatprep.subr.mxu0 0.0
        %1218 = vmatpush1.msra.mxu0 0.0
        %1219 = vmatprep.subr.mxu0 0.0
        %1220 = vmatpush1.msra.mxu0 0.0
        %1221 = vmatprep.subr.mxu0 0.0
        %1222 = vmatpush1.msra.mxu0 0.0
        %1223 = vmatprep.subr.mxu0 0.0
        %1224 = vmatpush1.msra.mxu0 0.0
        %1225 = vmatprep.subr.mxu0 0.0
        %1226 = vmatpush1.msra.mxu0 0.0
        %1227 = vmatprep.subr.mxu0 0.0
        %1228 = vmatpush1.msra.mxu0 0.0
        %1229 = vmatprep.subr.mxu0 0.0
        %1230 = vmatpush1.msra.mxu0 0.0
        %1231 = vmatprep.subr.mxu0 0.0
        %1232 = vmatpush1.msra.mxu0 0.0
        %1233 = vmatprep.subr.mxu0 0.0
        %1234 = vmatpush1.msra.mxu0 0.0
        %1235 = vmatprep.mubr.f32.mxu0 0.0
        %1236 = vmatmul.mubr.f32.gmra.mrb[0].mxu0 %v1170
        %v1237 = vpop.f32.mrb[0].mxu0
        %v1238 = vadd.f32 0.0, %v1237
        %v1239 = vpop.f32.mrb[0].mxu0
        %v1240 = vadd.f32 0.0, %v1239
        %1241 = vdwg.mxu0
        %v1242 = vadd.f32 %v1240, %v328
        %s1243 = scalar_lea.vmem %s203, 88 [#allocation8]
        %1244 = vst [vmem:[%s1243] sm:$0xff] %v1242
        %s1245 = scalar_lea.vmem %s177, 96 [#allocation3]
        %v1246 = vld [vmem:[%s1245] sm:$0xff]
        %v1247 = vadd.f32 %v1238, %v1246
        %v1248 = vxor.u32 %v1247, 2147483648
        %v1249 = vmul.f32 %v1248, 1.442695
        %v1250 = vpow.pop %v1249
        %v1251 = vadd.f32 %v1250, 1.0
        %v1252 = vrcp.pop %v1251
        %v1253 = vmul.f32 1.0, %v1252
        %1254 = vmatprep.subr.mxu0 %v212
        %1255 = vmatpush1.msra.mxu0 %v211
        %1256 = vmatprep.subr.mxu0 %v214
        %1257 = vmatpush1.msra.mxu0 %v213
        %1258 = vmatprep.subr.mxu0 %v216
        %1259 = vmatpush1.msra.mxu0 %v215
        %1260 = vmatprep.subr.mxu0 %v218
        %1261 = vmatpush1.msra.mxu0 %v217
        %1262 = vmatprep.subr.mxu0 %v220
        %1263 = vmatpush1.msra.mxu0 %v219
        %1264 = vmatprep.subr.mxu0 %v222
        %1265 = vmatpush1.msra.mxu0 %v221
        %1266 = vmatprep.subr.mxu0 %v224
        %1267 = vmatpush1.msra.mxu0 %v223
        %1268 = vmatprep.subr.mxu0 %v226
        %1269 = vmatpush1.msra.mxu0 %v225
        %1270 = vmatprep.subr.mxu0 %v228
        %1271 = vmatpush1.msra.mxu0 %v227
        %1272 = vmatprep.subr.mxu0 %v230
        %1273 = vmatpush1.msra.mxu0 %v229
        %1274 = vmatprep.subr.mxu0 %v232
        %1275 = vmatpush1.msra.mxu0 %v231
        %1276 = vmatprep.subr.mxu0 %v234
        %1277 = vmatpush1.msra.mxu0 %v233
        %1278 = vmatprep.subr.mxu0 %v236
        %1279 = vmatpush1.msra.mxu0 %v235
        %1280 = vmatprep.subr.mxu0 %v238
        %1281 = vmatpush1.msra.mxu0 %v237
        %1282 = vmatprep.subr.mxu0 %v240
        %1283 = vmatpush1.msra.mxu0 %v239
        %1284 = vmatprep.subr.mxu0 %v242
        %1285 = vmatpush1.msra.mxu0 %v241
        %1286 = vmatprep.subr.mxu0 0.0
        %1287 = vmatpush1.msra.mxu0 0.0
        %1288 = vmatprep.subr.mxu0 0.0
        %1289 = vmatpush1.msra.mxu0 0.0
        %1290 = vmatprep.subr.mxu0 0.0
        %1291 = vmatpush1.msra.mxu0 0.0
        %1292 = vmatprep.subr.mxu0 0.0
        %1293 = vmatpush1.msra.mxu0 0.0
        %1294 = vmatprep.subr.mxu0 0.0
        %1295 = vmatpush1.msra.mxu0 0.0
        %1296 = vmatprep.subr.mxu0 0.0
        %1297 = vmatpush1.msra.mxu0 0.0
        %1298 = vmatprep.subr.mxu0 0.0
        %1299 = vmatpush1.msra.mxu0 0.0
        %1300 = vmatprep.subr.mxu0 0.0
        %1301 = vmatpush1.msra.mxu0 0.0
        %1302 = vmatprep.subr.mxu0 0.0
        %1303 = vmatpush1.msra.mxu0 0.0
        %1304 = vmatprep.subr.mxu0 0.0
        %1305 = vmatpush1.msra.mxu0 0.0
        %1306 = vmatprep.subr.mxu0 0.0
        %1307 = vmatpush1.msra.mxu0 0.0
        %1308 = vmatprep.subr.mxu0 0.0
        %1309 = vmatpush1.msra.mxu0 0.0
        %1310 = vmatprep.subr.mxu0 0.0
        %1311 = vmatpush1.msra.mxu0 0.0
        %1312 = vmatprep.subr.mxu0 0.0
        %1313 = vmatpush1.msra.mxu0 0.0
        %1314 = vmatprep.subr.mxu0 0.0
        %1315 = vmatpush1.msra.mxu0 0.0
        %1316 = vmatprep.subr.mxu0 0.0
        %1317 = vmatpush1.msra.mxu0 0.0
        %1318 = vmatprep.mubr.f32.mxu0 0.0
        %1319 = vmatmul.mubr.f32.gmra.mrb[0].mxu0 %v1253
        %v1320 = vpop.f32.mrb[0].mxu0
        %v1321 = vadd.f32 0.0, %v1320
        %v1322 = vpop.f32.mrb[0].mxu0
        %v1323 = vadd.f32 0.0, %v1322
        %1324 = vdwg.mxu0
        %v1325 = vadd.f32 %v1323, %v328
        %s1326 = scalar_lea.vmem %s203, 96 [#allocation8]
        %1327 = vst [vmem:[%s1326] sm:$0xff] %v1325
        %s1328 = scalar_lea.vmem %s177, 104 [#allocation3]
        %v1329 = vld [vmem:[%s1328] sm:$0xff]
        %v1330 = vadd.f32 %v1321, %v1329
        %v1331 = vxor.u32 %v1330, 2147483648
        %v1332 = vmul.f32 %v1331, 1.442695
        %v1333 = vpow.pop %v1332
        %v1334 = vadd.f32 %v1333, 1.0
        %v1335 = vrcp.pop %v1334
        %v1336 = vmul.f32 1.0, %v1335
        %1337 = vmatprep.subr.mxu0 %v212
        %1338 = vmatpush1.msra.mxu0 %v211
        %1339 = vmatprep.subr.mxu0 %v214
        %1340 = vmatpush1.msra.mxu0 %v213
        %1341 = vmatprep.subr.mxu0 %v216
        %1342 = vmatpush1.msra.mxu0 %v215
        %1343 = vmatprep.subr.mxu0 %v218
        %1344 = vmatpush1.msra.mxu0 %v217
        %1345 = vmatprep.subr.mxu0 %v220
        %1346 = vmatpush1.msra.mxu0 %v219
        %1347 = vmatprep.subr.mxu0 %v222
        %1348 = vmatpush1.msra.mxu0 %v221
        %1349 = vmatprep.subr.mxu0 %v224
        %1350 = vmatpush1.msra.mxu0 %v223
        %1351 = vmatprep.subr.mxu0 %v226
        %1352 = vmatpush1.msra.mxu0 %v225
        %1353 = vmatprep.subr.mxu0 %v228
        %1354 = vmatpush1.msra.mxu0 %v227
        %1355 = vmatprep.subr.mxu0 %v230
        %1356 = vmatpush1.msra.mxu0 %v229
        %1357 = vmatprep.subr.mxu0 %v232
        %1358 = vmatpush1.msra.mxu0 %v231
        %1359 = vmatprep.subr.mxu0 %v234
        %1360 = vmatpush1.msra.mxu0 %v233
        %1361 = vmatprep.subr.mxu0 %v236
        %1362 = vmatpush1.msra.mxu0 %v235
        %1363 = vmatprep.subr.mxu0 %v238
        %1364 = vmatpush1.msra.mxu0 %v237
        %1365 = vmatprep.subr.mxu0 %v240
        %1366 = vmatpush1.msra.mxu0 %v239
        %1367 = vmatprep.subr.mxu0 %v242
        %1368 = vmatpush1.msra.mxu0 %v241
        %1369 = vmatprep.subr.mxu0 0.0
        %1370 = vmatpush1.msra.mxu0 0.0
        %1371 = vmatprep.subr.mxu0 0.0
        %1372 = vmatpush1.msra.mxu0 0.0
        %1373 = vmatprep.subr.mxu0 0.0
        %1374 = vmatpush1.msra.mxu0 0.0
        %1375 = vmatprep.subr.mxu0 0.0
        %1376 = vmatpush1.msra.mxu0 0.0
        %1377 = vmatprep.subr.mxu0 0.0
        %1378 = vmatpush1.msra.mxu0 0.0
        %1379 = vmatprep.subr.mxu0 0.0
        %1380 = vmatpush1.msra.mxu0 0.0
        %1381 = vmatprep.subr.mxu0 0.0
        %1382 = vmatpush1.msra.mxu0 0.0
        %1383 = vmatprep.subr.mxu0 0.0
        %1384 = vmatpush1.msra.mxu0 0.0
        %1385 = vmatprep.subr.mxu0 0.0
        %1386 = vmatpush1.msra.mxu0 0.0
        %1387 = vmatprep.subr.mxu0 0.0
        %1388 = vmatpush1.msra.mxu0 0.0
        %1389 = vmatprep.subr.mxu0 0.0
        %1390 = vmatpush1.msra.mxu0 0.0
        %1391 = vmatprep.subr.mxu0 0.0
        %1392 = vmatpush1.msra.mxu0 0.0
        %1393 = vmatprep.subr.mxu0 0.0
        %1394 = vmatpush1.msra.mxu0 0.0
        %1395 = vmatprep.subr.mxu0 0.0
        %1396 = vmatpush1.msra.mxu0 0.0
        %1397 = vmatprep.subr.mxu0 0.0
        %1398 = vmatpush1.msra.mxu0 0.0
        %1399 = vmatprep.subr.mxu0 0.0
        %1400 = vmatpush1.msra.mxu0 0.0
        %1401 = vmatprep.mubr.f32.mxu0 0.0
        %1402 = vmatmul.mubr.f32.gmra.mrb[0].mxu0 %v1336
        %v1403 = vpop.f32.mrb[0].mxu0
        %v1404 = vadd.f32 0.0, %v1403
        %v1405 = vpop.f32.mrb[0].mxu0
        %v1406 = vadd.f32 0.0, %v1405
        %1407 = vdwg.mxu0
        %v1408 = vadd.f32 %v1406, %v328
        %s1409 = scalar_lea.vmem %s203, 104 [#allocation8]
        %1410 = vst [vmem:[%s1409] sm:$0xff] %v1408
        %s1411 = scalar_lea.vmem %s177, 112 [#allocation3]
        %v1412 = vld [vmem:[%s1411] sm:$0xff]
        %v1413 = vadd.f32 %v1404, %v1412
        %v1414 = vxor.u32 %v1413, 2147483648
        %v1415 = vmul.f32 %v1414, 1.442695
        %v1416 = vpow.pop %v1415
        %v1417 = vadd.f32 %v1416, 1.0
        %v1418 = vrcp.pop %v1417
        %v1419 = vmul.f32 1.0, %v1418
        %1420 = vmatprep.subr.mxu0 %v212
        %1421 = vmatpush1.msra.mxu0 %v211
        %1422 = vmatprep.subr.mxu0 %v214
        %1423 = vmatpush1.msra.mxu0 %v213
        %1424 = vmatprep.subr.mxu0 %v216
        %1425 = vmatpush1.msra.mxu0 %v215
        %1426 = vmatprep.subr.mxu0 %v218
        %1427 = vmatpush1.msra.mxu0 %v217
        %1428 = vmatprep.subr.mxu0 %v220
        %1429 = vmatpush1.msra.mxu0 %v219
        %1430 = vmatprep.subr.mxu0 %v222
        %1431 = vmatpush1.msra.mxu0 %v221
        %1432 = vmatprep.subr.mxu0 %v224
        %1433 = vmatpush1.msra.mxu0 %v223
        %1434 = vmatprep.subr.mxu0 %v226
        %1435 = vmatpush1.msra.mxu0 %v225
        %1436 = vmatprep.subr.mxu0 %v228
        %1437 = vmatpush1.msra.mxu0 %v227
        %1438 = vmatprep.subr.mxu0 %v230
        %1439 = vmatpush1.msra.mxu0 %v229
        %1440 = vmatprep.subr.mxu0 %v232
        %1441 = vmatpush1.msra.mxu0 %v231
        %1442 = vmatprep.subr.mxu0 %v234
        %1443 = vmatpush1.msra.mxu0 %v233
        %1444 = vmatprep.subr.mxu0 %v236
        %1445 = vmatpush1.msra.mxu0 %v235
        %1446 = vmatprep.subr.mxu0 %v238
        %1447 = vmatpush1.msra.mxu0 %v237
        %1448 = vmatprep.subr.mxu0 %v240
        %1449 = vmatpush1.msra.mxu0 %v239
        %1450 = vmatprep.subr.mxu0 %v242
        %1451 = vmatpush1.msra.mxu0 %v241
        %1452 = vmatprep.subr.mxu0 0.0
        %1453 = vmatpush1.msra.mxu0 0.0
        %1454 = vmatprep.subr.mxu0 0.0
        %1455 = vmatpush1.msra.mxu0 0.0
        %1456 = vmatprep.subr.mxu0 0.0
        %1457 = vmatpush1.msra.mxu0 0.0
        %1458 = vmatprep.subr.mxu0 0.0
        %1459 = vmatpush1.msra.mxu0 0.0
        %1460 = vmatprep.subr.mxu0 0.0
        %1461 = vmatpush1.msra.mxu0 0.0
        %1462 = vmatprep.subr.mxu0 0.0
        %1463 = vmatpush1.msra.mxu0 0.0
        %1464 = vmatprep.subr.mxu0 0.0
        %1465 = vmatpush1.msra.mxu0 0.0
        %1466 = vmatprep.subr.mxu0 0.0
        %1467 = vmatpush1.msra.mxu0 0.0
        %1468 = vmatprep.subr.mxu0 0.0
        %1469 = vmatpush1.msra.mxu0 0.0
        %1470 = vmatprep.subr.mxu0 0.0
        %1471 = vmatpush1.msra.mxu0 0.0
        %1472 = vmatprep.subr.mxu0 0.0
        %1473 = vmatpush1.msra.mxu0 0.0
        %1474 = vmatprep.subr.mxu0 0.0
        %1475 = vmatpush1.msra.mxu0 0.0
        %1476 = vmatprep.subr.mxu0 0.0
        %1477 = vmatpush1.msra.mxu0 0.0
        %1478 = vmatprep.subr.mxu0 0.0
        %1479 = vmatpush1.msra.mxu0 0.0
        %1480 = vmatprep.subr.mxu0 0.0
        %1481 = vmatpush1.msra.mxu0 0.0
        %1482 = vmatprep.subr.mxu0 0.0
        %1483 = vmatpush1.msra.mxu0 0.0
        %1484 = vmatprep.mubr.f32.mxu0 0.0
        %1485 = vmatmul.mubr.f32.gmra.mrb[0].mxu0 %v1419
        %v1486 = vpop.f32.mrb[0].mxu0
        %v1487 = vadd.f32 0.0, %v1486
        %v1488 = vpop.f32.mrb[0].mxu0
        %v1489 = vadd.f32 0.0, %v1488
        %1490 = vdwg.mxu0
        %v1491 = vadd.f32 %v1489, %v328
        %s1492 = scalar_lea.vmem %s203, 112 [#allocation8]
        %1493 = vst [vmem:[%s1492] sm:$0xff] %v1491
        %s1494 = scalar_lea.vmem %s177, 120 [#allocation3]
        %v1495 = vld [vmem:[%s1494] sm:$0xff]
        %v1496 = vadd.f32 %v1487, %v1495
        %v1497 = vxor.u32 %v1496, 2147483648
        %v1498 = vmul.f32 %v1497, 1.442695
        %v1499 = vpow.pop %v1498
        %v1500 = vadd.f32 %v1499, 1.0
        %v1501 = vrcp.pop %v1500
        %v1502 = vmul.f32 1.0, %v1501
        %1503 = vmatprep.subr.mxu0 %v212
        %1504 = vmatpush1.msra.mxu0 %v211
        %1505 = vmatprep.subr.mxu0 %v214
        %1506 = vmatpush1.msra.mxu0 %v213
        %1507 = vmatprep.subr.mxu0 %v216
        %1508 = vmatpush1.msra.mxu0 %v215
        %1509 = vmatprep.subr.mxu0 %v218
        %1510 = vmatpush1.msra.mxu0 %v217
        %1511 = vmatprep.subr.mxu0 %v220
        %1512 = vmatpush1.msra.mxu0 %v219
        %1513 = vmatprep.subr.mxu0 %v222
        %1514 = vmatpush1.msra.mxu0 %v221
        %1515 = vmatprep.subr.mxu0 %v224
        %1516 = vmatpush1.msra.mxu0 %v223
        %1517 = vmatprep.subr.mxu0 %v226
        %1518 = vmatpush1.msra.mxu0 %v225
        %1519 = vmatprep.subr.mxu0 %v228
        %1520 = vmatpush1.msra.mxu0 %v227
        %1521 = vmatprep.subr.mxu0 %v230
        %1522 = vmatpush1.msra.mxu0 %v229
        %1523 = vmatprep.subr.mxu0 %v232
        %1524 = vmatpush1.msra.mxu0 %v231
        %1525 = vmatprep.subr.mxu0 %v234
        %1526 = vmatpush1.msra.mxu0 %v233
        %1527 = vmatprep.subr.mxu0 %v236
        %1528 = vmatpush1.msra.mxu0 %v235
        %1529 = vmatprep.subr.mxu0 %v238
        %1530 = vmatpush1.msra.mxu0 %v237
        %1531 = vmatprep.subr.mxu0 %v240
        %1532 = vmatpush1.msra.mxu0 %v239
        %1533 = vmatprep.subr.mxu0 %v242
        %1534 = vmatpush1.msra.mxu0 %v241
        %1535 = vmatprep.subr.mxu0 0.0
        %1536 = vmatpush1.msra.mxu0 0.0
        %1537 = vmatprep.subr.mxu0 0.0
        %1538 = vmatpush1.msra.mxu0 0.0
        %1539 = vmatprep.subr.mxu0 0.0
        %1540 = vmatpush1.msra.mxu0 0.0
        %1541 = vmatprep.subr.mxu0 0.0
        %1542 = vmatpush1.msra.mxu0 0.0
        %1543 = vmatprep.subr.mxu0 0.0
        %1544 = vmatpush1.msra.mxu0 0.0
        %1545 = vmatprep.subr.mxu0 0.0
        %1546 = vmatpush1.msra.mxu0 0.0
        %1547 = vmatprep.subr.mxu0 0.0
        %1548 = vmatpush1.msra.mxu0 0.0
        %1549 = vmatprep.subr.mxu0 0.0
        %1550 = vmatpush1.msra.mxu0 0.0
        %1551 = vmatprep.subr.mxu0 0.0
        %1552 = vmatpush1.msra.mxu0 0.0
        %1553 = vmatprep.subr.mxu0 0.0
        %1554 = vmatpush1.msra.mxu0 0.0
        %1555 = vmatprep.subr.mxu0 0.0
        %1556 = vmatpush1.msra.mxu0 0.0
        %1557 = vmatprep.subr.mxu0 0.0
        %1558 = vmatpush1.msra.mxu0 0.0
        %1559 = vmatprep.subr.mxu0 0.0
        %1560 = vmatpush1.msra.mxu0 0.0
        %1561 = vmatprep.subr.mxu0 0.0
        %1562 = vmatpush1.msra.mxu0 0.0
        %1563 = vmatprep.subr.mxu0 0.0
        %1564 = vmatpush1.msra.mxu0 0.0
        %1565 = vmatprep.subr.mxu0 0.0
        %1566 = vmatpush1.msra.mxu0 0.0
        %1567 = vmatprep.mubr.f32.mxu0 0.0
        %1568 = vmatmul.mubr.f32.gmra.mrb[0].mxu0 %v1502
        %v1569 = vpop.f32.mrb[0].mxu0
        %v1570 = vadd.f32 0.0, %v1569
        %v1571 = vpop.f32.mrb[0].mxu0
        %v1572 = vadd.f32 0.0, %v1571
        %1573 = vdwg.mxu0
        %v1574 = vadd.f32 %v1572, %v328
        %s1575 = scalar_lea.vmem %s203, 120 [#allocation8]
        %1576 = vst [vmem:[%s1575] sm:$0xff] %v1574
        %1577 = vst [vmem:[#allocation2] sm:$0xff] %v1570
        %s1578 = sand.u32 %s97, 1
        %s1579 = scalar_lea.sflag [#allocation5], %s1578
        %s1580 = sand.u32 %s97, 1
        %s1581 = smul.addr %s1580, 128
        %s1582 = scalar_lea.vmem [#allocation8], %s1581
        // Predicated region
        $region45: #{tpu_custom_call.1} parent=31 // pred_check
          %p1583 = pneg %p107
        $region46: #{tpu_custom_call.1} parent=31 // pred_check_branch
          %1585 = sbr.rel (%p1583) target = $region48
        $region47: #{tpu_custom_call.1} parent=31 // pred_region
          %s1586 = smul.u32 16, %s21
          %s1588 = ssub.s32 2048, 2048
          %1589 = vsyncadd %s1579, %s1588
          %s1590 = smul.addr %s1586, 128
          %s1591 = scalar_lea.hbm %s3, %s1590
          %s1592 = sshll.u32 %s1582, 4
          %s1593 = int_to_ptr.vmem [resolvable:$true] %s1592
          %1598 = dma.vmem_to_hbm [thread:$0]  %s1593, 2048, %s1591, %s1579, 128, 128, 8
        $region48: #{tpu_custom_call.1} parent=31 // pred_fallthru
          _
      $region32: #{tpu_custom_call.1} parent=5 // pred_fallthru
        _
      %p1599 = scmp.le.s32.totalorder 2, %s16
      // Predicated region
      $region49: #{tpu_custom_call.1} parent=5 // pred_check
        %p1600 = pneg %p1599
      $region50: #{tpu_custom_call.1} parent=5 // pred_check_branch
        %1602 = sbr.rel (%p1600) target = $region52
      $region51: #{tpu_custom_call.1} parent=5 // pred_region
        %s1603 = ssub.s32 %s16, 2
        // Predicated region
        $region53: #{tpu_custom_call.1} parent=51 // pred_check
          %p1604 = pneg %p113
        $region54: #{tpu_custom_call.1} parent=51 // pred_check_branch
          %1606 = sbr.rel (%p1604) target = $region56
        $region55: #{tpu_custom_call.1} parent=51 // pred_region
          %s1607 = sand.u32 %s98, 1
          %s1608 = scalar_lea.sflag [#allocation5], %s1607
          %s1609 = sand.u32 %s98, 1
          %s1610 = smul.addr %s1609, 128
          %s1611 = scalar_lea.vmem [#allocation8], %s1610
          %1612 = dma.done %s1608, 2048
        $region56: #{tpu_custom_call.1} parent=51 // pred_fallthru
          _
      $region52: #{tpu_custom_call.1} parent=5 // pred_fallthru
        _
    $region6: #{tpu_custom_call.1} parent=1 // loop_footer
      %s20 = sadd.s32 1, %s16
    $region7: #{tpu_custom_call.1} parent=1 // loop_footer_branch
      %15 = sbr.rel target = $region3
    $region8: #{tpu_custom_call.1} parent=1 // loop_exit
      _
    %1613 = vsyncpa [#allocation4], 1
    %s1614 = scalar_lea.sflag [#allocation4], 1
    %1615 = vsyncpa %s1614, 1
    %1616 = vsyncpa [#allocation7], 1
    %1617 = vsyncpa [#allocation5], 1
    %s1618 = scalar_lea.sflag [#allocation5], 1
    %1619 = vsyncpa %s1618, 1

</llo_original>
